<compile_context>
chip_gen: v7x
topology: tpu7x:2x2x1
jax: 0.10.0
libtpu: 0.0.40
codegen_flags: <defaults>
</compile_context>

<pallas_src>
import jax
import jax.numpy as jnp
from jax import lax
from jax.experimental import pallas as pl
from jax.experimental.pallas import tpu as pltpu


def _round_up(x, m):
    return -(-x // m) * m


def _nwa_kernel(x_ref, s_ref, e_ref, r_ref, b_ref, o_ref):
    # x_ref: (bb, T*H) lane-dense activation tile (native dtype), VMEM.
    # s_ref: (T*H, T)  S[t*H+h, t] = fc.weight[0, h]        (score projection)
    # e_ref: (T,  T*H) E[t, t*H+h] = 1                      (weight broadcast)
    # r_ref: (T*H, H)  R[t*H+h, h] = 1                      (group-sum over T)
    # b_ref: (1,) SMEM fc bias.   o_ref: (bb, H) VMEM context output.
    x = x_ref[...].astype(jnp.float32)                       # (bb, TH)
    bias = b_ref[0]                                          # scalar from SMEM

    # fc (H -> 1) for every time step, as one MXU matmul on the flat tile:
    #   scores[b, t] = sum_h x[b, t*H + h] * w[h] + bias
    scores = jnp.dot(x, s_ref[...],
                     preferred_element_type=jnp.float32,
                     precision=lax.Precision.HIGHEST) + bias  # (bb, T)

    # Numerically-stable softmax numerator over T; normalization deferred.
    m = jnp.max(scores, axis=1, keepdims=True)                # (bb, 1)
    e = jnp.exp(scores - m)                                   # (bb, T)
    inv_denom = 1.0 / jnp.sum(e, axis=1, keepdims=True)       # (bb, 1), exact

    # Broadcast e to the flat lane-dense layout on the MXU (0/1 matrix =>
    # exact), do the single full-tile VPU multiply, then group-sum over T
    # with a second 0/1 MXU matmul.
    e_flat = jnp.dot(e, e_ref[...],
                     preferred_element_type=jnp.float32,
                     precision=lax.Precision.HIGHEST)          # (bb, TH)
    ctx = jnp.dot(e_flat * x, r_ref[...],
                  preferred_element_type=jnp.float32,
                  precision=lax.Precision.HIGHEST)             # (bb, H)

    o_ref[...] = (ctx * inv_denom).astype(o_ref.dtype)


def naive_weighted_aggregation(x, w, b, *, batch_block=None,
                               target_tile_bytes=4 << 20):
    """x: (B, T, H); w: (1, H) fc weight; b: (1,) fc bias. Returns (B, H) f32."""
    B, T, H = x.shape
    assert w.shape == (1, H), w.shape
    assert b.shape == (1,), b.shape
    TH = T * H
    itemsize = jnp.dtype(x.dtype).itemsize
    row_bytes = TH * itemsize

    # ---- batch-block selection: multiple of 8, ~target_tile_bytes of real
    # activation bytes per grid step, decoupled from B's factorization. ----
    if batch_block is None:
        bb = max(8, (target_tile_bytes // row_bytes) // 8 * 8)
        bb = min(bb, _round_up(B, 8))
        # Give the v7x megacore at least 2 grid steps when the batch allows.
        if pl.cdiv(B, bb) == 1 and _round_up(B, 8) >= 16:
            bb = _round_up(_round_up(B, 8) // 2, 8)
    else:
        bb = _round_up(batch_block, 8)
    grid = pl.cdiv(B, bb)
    B_pad = grid * bb

    # ---- lane-dense flat activation view (row-major, no data movement). ----
    x_flat = x.reshape(B, TH)
    if B_pad != B:
        # Zero padding is NaN-safe (uniform softmax over constant scores,
        # zero context); padded rows are sliced off below.
        x_flat = jnp.pad(x_flat, ((0, B_pad - B), (0, 0)))

    # ---- tiny constant operands that drive the MXU-side projection /
    # broadcast / group-sum on the flat layout. ----
    wf = w.astype(jnp.float32)
    eye_t = jnp.eye(T, dtype=jnp.float32)
    S = jnp.kron(eye_t, wf.reshape(H, 1))                     # (TH, T)
    E = jnp.kron(eye_t, jnp.ones((1, H), jnp.float32))        # (T, TH)
    R = jnp.kron(jnp.ones((T, 1), jnp.float32),
                 jnp.eye(H, dtype=jnp.float32))               # (TH, H)
    bf = b.astype(jnp.float32)

    # ---- explicit VMEM budget: double-buffered input tile + ~4 f32
    # tile-sized temporaries + headroom (safe on v7x's 64 MiB VMEM with the
    # default 4 MiB tile target; above the 16/32 MiB scoped defaults). ----
    in_tile = bb * TH * itemsize
    f32_tile = bb * TH * 4
    vmem_limit = max(32 << 20,
                     min(2 * in_tile + 4 * f32_tile + (4 << 20), 96 << 20))

    out = pl.pallas_call(
        _nwa_kernel,
        out_shape=jax.ShapeDtypeStruct((B_pad, H), jnp.float32),
        grid_spec=pltpu.PrefetchScalarGridSpec(
            num_scalar_prefetch=0,
            grid=(grid,),
            in_specs=[
                pl.BlockSpec((bb, TH), lambda i: (i, 0)),           # x (flat)
                pl.BlockSpec((TH, T), lambda i: (0, 0)),            # S
                pl.BlockSpec((T, TH), lambda i: (0, 0)),            # E
                pl.BlockSpec((TH, H), lambda i: (0, 0)),            # R
                pl.BlockSpec(memory_space=pltpu.MemorySpace.SMEM),  # fc bias
            ],
            out_specs=pl.BlockSpec((bb, H), lambda i: (i, 0)),
        ),
        compiler_params=pltpu.CompilerParams(
            dimension_semantics=("parallel",),
            vmem_limit_bytes=int(vmem_limit)),
    )(x_flat, S, E, R, bf)

    return out[:B] if B_pad != B else out


def reference(x, w, b):
    """Pure-JAX mirror of the PyTorch forward for validation."""
    scores = jnp.einsum('bth,oh->bto', x, w)[..., 0] + b[0]   # (B, T)
    wts = jax.nn.softmax(scores, axis=1)                      # softmax over T
    return jnp.sum(wts[:, :, None] * x, axis=1)               # (B, H)


if __name__ == "__main__":
    # x: (batch, seq, hidden_dim).  sensor_channel is unused by this module.
    B, T, H = 2, 8, 32
    key = jax.random.PRNGKey(0)
    kx, kw, kb = jax.random.split(key, 3)
    x = jax.random.normal(kx, (B, T, H), jnp.float32)
    w = 0.1 * jax.random.normal(kw, (1, H), jnp.float32)   # nn.Linear(H, 1).weight
    b = 0.1 * jax.random.normal(kb, (1,), jnp.float32)     # nn.Linear(H, 1).bias

    out = naive_weighted_aggregation(x, w, b)
    out = jax.block_until_ready(out)

    ref = reference(x, w, b)
    assert out.shape == (B, H), out.shape
    assert jnp.allclose(out, ref, rtol=1e-5, atol=1e-5), \
        float(jnp.max(jnp.abs(out - ref)))
    print("KERNEL_OK")
</pallas_src>

<mosaic_0001>
module attributes {stable_mosaic.version = 11 : i64} {
  func.func @_nwa_kernel(%arg0: i32, %arg1: memref<8x256xf32, #tpu.memory_space<vmem>>, %arg2: memref<256x8xf32, #tpu.memory_space<vmem>>, %arg3: memref<8x256xf32, #tpu.memory_space<vmem>>, %arg4: memref<256x32xf32, #tpu.memory_space<vmem>>, %arg5: memref<1xf32, #tpu.memory_space<smem>>, %arg6: memref<8x32xf32, #tpu.memory_space<vmem>>) attributes {dimension_semantics = [#tpu.dimension_semantics<parallel>], iteration_bounds = array<i64: 1>, scalar_prefetch = 0 : i64, scratch_operands = 0 : i64, tpu.core_type = #tpu.core_type<tc>, window_params = [{transform_indices = @transform_0, window_bounds = array<i64: 8, 256>}, {pipeline_mode = #tpu.pipeline_mode<synchronous>, transform_indices = @transform_1, window_bounds = array<i64: 256, 8>}, {pipeline_mode = #tpu.pipeline_mode<synchronous>, transform_indices = @transform_2, window_bounds = array<i64: 8, 256>}, {pipeline_mode = #tpu.pipeline_mode<synchronous>, transform_indices = @transform_3, window_bounds = array<i64: 256, 32>}, {transform_indices = @transform_4, window_bounds = array<i64: 1>}, {transform_indices = @transform_5, window_bounds = array<i64: 8, 32>}]} {
    %c0 = arith.constant 0 : index
    %c0_0 = arith.constant 0 : index
    %0 = vector.load %arg1[%c0, %c0_0] : memref<8x256xf32, #tpu.memory_space<vmem>>, vector<8x256xf32>
    %c0_1 = arith.constant 0 : index
    %1 = memref.load %arg5[%c0_1] : memref<1xf32, #tpu.memory_space<smem>>
    %c0_2 = arith.constant 0 : index
    %c0_3 = arith.constant 0 : index
    %2 = vector.load %arg2[%c0_2, %c0_3] : memref<256x8xf32, #tpu.memory_space<vmem>>, vector<256x8xf32>
    %cst = arith.constant dense<0.000000e+00> : vector<8x8xf32>
    %3 = tpu.matmul %0, %2, %cst {dimension_numbers = #tpu.dot_dimension_numbers<[1], [0], [0], [1], [0, 0, 1, 1], [], []>, precision = #tpu.contract_precision<fp32>} : vector<8x256xf32>, vector<256x8xf32>, vector<8x8xf32> -> vector<8x8xf32>
    %4 = vector.broadcast %1 : f32 to vector<8x8xf32>
    %5 = arith.addf %3, %4 : vector<8x8xf32>
    %cst_4 = arith.constant dense<0xFF800000> : vector<8xf32>
    %6 = vector.multi_reduction <maximumf>, %5, %cst_4 [1] : vector<8x8xf32> to vector<8xf32>
    %7 = vector.shape_cast %6 : vector<8xf32> to vector<8x1xf32>
    %8 = vector.broadcast %7 : vector<8x1xf32> to vector<8x8xf32>
    %9 = arith.subf %5, %8 : vector<8x8xf32>
    %10 = math.exp %9 : vector<8x8xf32>
    %cst_5 = arith.constant dense<0.000000e+00> : vector<8xf32>
    %11 = vector.multi_reduction <add>, %10, %cst_5 [1] : vector<8x8xf32> to vector<8xf32>
    %12 = vector.shape_cast %11 : vector<8xf32> to vector<8x1xf32>
    %cst_6 = arith.constant 1.000000e+00 : f32
    %13 = vector.broadcast %cst_6 : f32 to vector<8x1xf32>
    %14 = arith.divf %13, %12 : vector<8x1xf32>
    %c0_7 = arith.constant 0 : index
    %c0_8 = arith.constant 0 : index
    %15 = vector.load %arg3[%c0_7, %c0_8] : memref<8x256xf32, #tpu.memory_space<vmem>>, vector<8x256xf32>
    %cst_9 = arith.constant dense<0.000000e+00> : vector<8x256xf32>
    %16 = tpu.matmul %10, %15, %cst_9 {dimension_numbers = #tpu.dot_dimension_numbers<[1], [0], [0], [1], [0, 0, 1, 1], [], []>, precision = #tpu.contract_precision<fp32>} : vector<8x8xf32>, vector<8x256xf32>, vector<8x256xf32> -> vector<8x256xf32>
    %17 = arith.mulf %16, %0 : vector<8x256xf32>
    %c0_10 = arith.constant 0 : index
    %c0_11 = arith.constant 0 : index
    %18 = vector.load %arg4[%c0_10, %c0_11] : memref<256x32xf32, #tpu.memory_space<vmem>>, vector<256x32xf32>
    %cst_12 = arith.constant dense<0.000000e+00> : vector<8x32xf32>
    %19 = tpu.matmul %17, %18, %cst_12 {dimension_numbers = #tpu.dot_dimension_numbers<[1], [0], [0], [1], [0, 0, 1, 1], [], []>, precision = #tpu.contract_precision<fp32>} : vector<8x256xf32>, vector<256x32xf32>, vector<8x32xf32> -> vector<8x32xf32>
    %20 = vector.broadcast %14 : vector<8x1xf32> to vector<8x32xf32>
    %21 = arith.mulf %19, %20 : vector<8x32xf32>
    %c0_13 = arith.constant 0 : index
    %c0_14 = arith.constant 0 : index
    %22 = vector.load %arg6[%c0_13, %c0_14] : memref<8x32xf32, #tpu.memory_space<vmem>>, vector<8x32xf32>
    tpu.vector_store %arg6[%c0_13, %c0_14], %21 {strides = array<i32>} : memref<8x32xf32, #tpu.memory_space<vmem>>, vector<8x32xf32>,
    return
  }
  func.func @transform_0(%arg0: i32) -> (i32, i32) {
    %c0_i32 = arith.constant 0 : i32
    %c0_i32_0 = arith.constant 0 : i32
    return %arg0, %c0_i32 : i32, i32
  }
  func.func @transform_1(%arg0: i32) -> (i32, i32) {
    %c0_i32 = arith.constant 0 : i32
    %c0_i32_0 = arith.constant 0 : i32
    %c0_i32_1 = arith.constant 0 : i32
    return %c0_i32, %c0_i32_0 : i32, i32
  }
  func.func @transform_2(%arg0: i32) -> (i32, i32) {
    %c0_i32 = arith.constant 0 : i32
    %c0_i32_0 = arith.constant 0 : i32
    %c0_i32_1 = arith.constant 0 : i32
    return %c0_i32, %c0_i32_0 : i32, i32
  }
  func.func @transform_3(%arg0: i32) -> (i32, i32) {
    %c0_i32 = arith.constant 0 : i32
    %c0_i32_0 = arith.constant 0 : i32
    %c0_i32_1 = arith.constant 0 : i32
    return %c0_i32, %c0_i32_0 : i32, i32
  }
  func.func @transform_4(%arg0: i32) -> i32 {
    %c0_i32 = arith.constant 0 : i32
    %c0_i32_0 = arith.constant 0 : i32
    return %c0_i32 : i32
  }
  func.func @transform_5(%arg0: i32) -> (i32, i32) {
    %c0_i32 = arith.constant 0 : i32
    %c0_i32_0 = arith.constant 0 : i32
    return %arg0, %c0_i32 : i32, i32
  }
}

</mosaic_0001>

<llo_original>
// kernel: tpu_custom_call.1
$region0: #{tpu_custom_call.1}
  #allocation0 [shape = 'u32[]', space=smem, size = 0x4, offset = 0x4, fixed_abs, tag = 'smem constant byte address 0x4 - core index']
  #allocation1 [shape = 'u32[144,128]{1,0:T(1,128)}', space=vmem, size = 0x12000, scoped, tag = 'internal scratch']
  #allocation2 [shape = 'f32[1]{0:T(128)S(6)}', space=smem, size = 0x200, scoped, tag = 'scoped memory for tpu_custom_call.1']
  %s0 = inlined_call_operand.vmem [shape: f32[8,256], index: 0, kind: input, shape index: {}]
  %s1 = inlined_call_operand.vmem [shape: f32[256,8], index: 1, kind: input, shape index: {}]
  %s2 = inlined_call_operand.vmem [shape: f32[8,256], index: 2, kind: input, shape index: {}]
  %s3 = inlined_call_operand.vmem [shape: f32[256,32], index: 3, kind: input, shape index: {}]
  %s4 = inlined_call_operand.<no memory space> [shape: f32[1], index: 4, kind: input, shape index: {}]
  %s5 = inlined_call_operand.hbm [shape: f32[8,32], index: 5, kind: output, shape index: {}]
  %s6 = sld [smem:[#allocation0]]
  $region30: #{tpu_custom_call.1} parent=0
    _
  %s8 = ssub.s32 1, %s6
  %s9 = scalar_select 0, %s8, %s6
  %10 = sst [smem:[#allocation2]] %s4
  $region1: #{tpu_custom_call.1} parent=0
    #allocation3 [shape = 'u8[4096]{0}', space=vmem, size = 0x1000, scoped, tag = 'output window, operand 0, single buffered']
    #allocation4 [shape = 's32[1]{0}', space=sflag, size = 0x4, scoped, tag = 'scoped memory for tpu_custom_call.1']
    %11 = vsyncpa [#allocation4], 0
    // Predicated region
    $region2: #{tpu_custom_call.1} parent=1 // pred_check
      _
    $region3: #{tpu_custom_call.1} parent=1 // pred_check_branch
      %13 = sbr.rel (0) target = $region5
    $region4: #{tpu_custom_call.1} parent=1 // pred_region
      _
    $region5: #{tpu_custom_call.1} parent=1 // pred_fallthru
      _
    // Predicated region
    $region6: #{tpu_custom_call.1} parent=1 // pred_check
      _
    $region7: #{tpu_custom_call.1} parent=1 // pred_check_branch
      %15 = sbr.rel (0) target = $region9
    $region8: #{tpu_custom_call.1} parent=1 // pred_region
      _
    $region9: #{tpu_custom_call.1} parent=1 // pred_fallthru
      _
    // Predicated region
    $region10: #{tpu_custom_call.1} parent=1 // pred_check
      _
    $region11: #{tpu_custom_call.1} parent=1 // pred_check_branch
      %17 = sbr.rel (0) target = $region13
    $region12: #{tpu_custom_call.1} parent=1 // pred_region
      _
    $region13: #{tpu_custom_call.1} parent=1 // pred_fallthru
      _
    // Predicated region
    $region14: #{tpu_custom_call.1} parent=1 // pred_check
      _
    $region15: #{tpu_custom_call.1} parent=1 // pred_check_branch
      %19 = sbr.rel (0) target = $region17
    $region16: #{tpu_custom_call.1} parent=1 // pred_region
      _
    $region17: #{tpu_custom_call.1} parent=1 // pred_fallthru
      _
    // Predicated region
    $region18: #{tpu_custom_call.1} parent=1 // pred_check
      _
    $region19: #{tpu_custom_call.1} parent=1 // pred_check_branch
      %21 = sbr.rel (0) target = $region21
    $region20: #{tpu_custom_call.1} parent=1 // pred_region
      _
    $region21: #{tpu_custom_call.1} parent=1 // pred_fallthru
      _
    %v22 = vld [vmem:[%s0] sm:$0xff]
    %v23 = vld [vmem:[%s0 + $0x8] sm:$0xff]
    %s24 = sld [smem:[#allocation2]]
    %v25 = vld [vmem:[%s1] sm:$0xff]
    %v26 = vld [vmem:[%s1 + $0x8] sm:$0xff]
    %v27 = vld [vmem:[%s1 + $0x10] sm:$0xff]
    %v28 = vld [vmem:[%s1 + $0x18] sm:$0xff]
    %v29 = vld [vmem:[%s1 + $0x20] sm:$0xff]
    %v30 = vld [vmem:[%s1 + $0x28] sm:$0xff]
    %v31 = vld [vmem:[%s1 + $0x30] sm:$0xff]
    %v32 = vld [vmem:[%s1 + $0x38] sm:$0xff]
    %v33 = vld [vmem:[%s1 + $0x40] sm:$0xff]
    %v34 = vld [vmem:[%s1 + $0x48] sm:$0xff]
    %v35 = vld [vmem:[%s1 + $0x50] sm:$0xff]
    %v36 = vld [vmem:[%s1 + $0x58] sm:$0xff]
    %v37 = vld [vmem:[%s1 + $0x60] sm:$0xff]
    %v38 = vld [vmem:[%s1 + $0x68] sm:$0xff]
    %v39 = vld [vmem:[%s1 + $0x70] sm:$0xff]
    %v40 = vld [vmem:[%s1 + $0x78] sm:$0xff]
    %v41 = vld [vmem:[%s1 + $0x80] sm:$0xff]
    %v42 = vld [vmem:[%s1 + $0x88] sm:$0xff]
    %v43 = vld [vmem:[%s1 + $0x90] sm:$0xff]
    %v44 = vld [vmem:[%s1 + $0x98] sm:$0xff]
    %v45 = vld [vmem:[%s1 + $0xa0] sm:$0xff]
    %v46 = vld [vmem:[%s1 + $0xa8] sm:$0xff]
    %v47 = vld [vmem:[%s1 + $0xb0] sm:$0xff]
    %v48 = vld [vmem:[%s1 + $0xb8] sm:$0xff]
    %v49 = vld [vmem:[%s1 + $0xc0] sm:$0xff]
    %v50 = vld [vmem:[%s1 + $0xc8] sm:$0xff]
    %v51 = vld [vmem:[%s1 + $0xd0] sm:$0xff]
    %v52 = vld [vmem:[%s1 + $0xd8] sm:$0xff]
    %v53 = vld [vmem:[%s1 + $0xe0] sm:$0xff]
    %v54 = vld [vmem:[%s1 + $0xe8] sm:$0xff]
    %v55 = vld [vmem:[%s1 + $0xf0] sm:$0xff]
    %v56 = vld [vmem:[%s1 + $0xf8] sm:$0xff]
    %v57 = vstv %s24
    %58 = vmatprep.subr.mxu0 0.0
    %v59 = vand.u32 %v25, 4294901760
    %60 = vmatpush1.msra.mxu0 %v59
    %61 = vmatprep.subr.mxu0 0.0
    %v62 = vand.u32 %v26, 4294901760
    %63 = vmatpush1.msra.mxu0 %v62
    %64 = vmatprep.subr.mxu0 0.0
    %v65 = vand.u32 %v27, 4294901760
    %66 = vmatpush1.msra.mxu0 %v65
    %67 = vmatprep.subr.mxu0 0.0
    %v68 = vand.u32 %v28, 4294901760
    %69 = vmatpush1.msra.mxu0 %v68
    %70 = vmatprep.subr.mxu0 0.0
    %v71 = vand.u32 %v29, 4294901760
    %72 = vmatpush1.msra.mxu0 %v71
    %73 = vmatprep.subr.mxu0 0.0
    %v74 = vand.u32 %v30, 4294901760
    %75 = vmatpush1.msra.mxu0 %v74
    %76 = vmatprep.subr.mxu0 0.0
    %v77 = vand.u32 %v31, 4294901760
    %78 = vmatpush1.msra.mxu0 %v77
    %79 = vmatprep.subr.mxu0 0.0
    %v80 = vand.u32 %v32, 4294901760
    %81 = vmatpush1.msra.mxu0 %v80
    %82 = vmatprep.subr.mxu0 0.0
    %v83 = vand.u32 %v33, 4294901760
    %84 = vmatpush1.msra.mxu0 %v83
    %85 = vmatprep.subr.mxu0 0.0
    %v86 = vand.u32 %v34, 4294901760
    %87 = vmatpush1.msra.mxu0 %v86
    %88 = vmatprep.subr.mxu0 0.0
    %v89 = vand.u32 %v35, 4294901760
    %90 = vmatpush1.msra.mxu0 %v89
    %91 = vmatprep.subr.mxu0 0.0
    %v92 = vand.u32 %v36, 4294901760
    %93 = vmatpush1.msra.mxu0 %v92
    %94 = vmatprep.subr.mxu0 0.0
    %v95 = vand.u32 %v37, 4294901760
    %96 = vmatpush1.msra.mxu0 %v95
    %97 = vmatprep.subr.mxu0 0.0
    %v98 = vand.u32 %v38, 4294901760
    %99 = vmatpush1.msra.mxu0 %v98
    %100 = vmatprep.subr.mxu0 0.0
    %v101 = vand.u32 %v39, 4294901760
    %102 = vmatpush1.msra.mxu0 %v101
    %103 = vmatprep.subr.mxu0 0.0
    %v104 = vand.u32 %v40, 4294901760
    %105 = vmatpush1.msra.mxu0 %v104
    %106 = vmatprep.subr.mxu0 0.0
    %v107 = vand.u32 %v41, 4294901760
    %108 = vmatpush1.msra.mxu0 %v107
    %109 = vmatprep.subr.mxu0 0.0
    %v110 = vand.u32 %v42, 4294901760
    %111 = vmatpush1.msra.mxu0 %v110
    %112 = vmatprep.subr.mxu0 0.0
    %v113 = vand.u32 %v43, 4294901760
    %114 = vmatpush1.msra.mxu0 %v113
    %115 = vmatprep.subr.mxu0 0.0
    %v116 = vand.u32 %v44, 4294901760
    %117 = vmatpush1.msra.mxu0 %v116
    %118 = vmatprep.subr.mxu0 0.0
    %v119 = vand.u32 %v45, 4294901760
    %120 = vmatpush1.msra.mxu0 %v119
    %121 = vmatprep.subr.mxu0 0.0
    %v122 = vand.u32 %v46, 4294901760
    %123 = vmatpush1.msra.mxu0 %v122
    %124 = vmatprep.subr.mxu0 0.0
    %v125 = vand.u32 %v47, 4294901760
    %126 = vmatpush1.msra.mxu0 %v125
    %127 = vmatprep.subr.mxu0 0.0
    %v128 = vand.u32 %v48, 4294901760
    %129 = vmatpush1.msra.mxu0 %v128
    %130 = vmatprep.subr.mxu0 0.0
    %v131 = vand.u32 %v49, 4294901760
    %132 = vmatpush1.msra.mxu0 %v131
    %133 = vmatprep.subr.mxu0 0.0
    %v134 = vand.u32 %v50, 4294901760
    %135 = vmatpush1.msra.mxu0 %v134
    %136 = vmatprep.subr.mxu0 0.0
    %v137 = vand.u32 %v51, 4294901760
    %138 = vmatpush1.msra.mxu0 %v137
    %139 = vmatprep.subr.mxu0 0.0
    %v140 = vand.u32 %v52, 4294901760
    %141 = vmatpush1.msra.mxu0 %v140
    %142 = vmatprep.subr.mxu0 0.0
    %v143 = vand.u32 %v53, 4294901760
    %144 = vmatpush1.msra.mxu0 %v143
    %145 = vmatprep.subr.mxu0 0.0
    %v146 = vand.u32 %v54, 4294901760
    %147 = vmatpush1.msra.mxu0 %v146
    %148 = vmatprep.subr.mxu0 0.0
    %v149 = vand.u32 %v55, 4294901760
    %150 = vmatpush1.msra.mxu0 %v149
    %151 = vmatprep.subr.mxu0 0.0
    %v152 = vand.u32 %v56, 4294901760
    %153 = vmatpush1.msra.mxu0 %v152
    %v154 = vand.u32 %v23, 4294901760
    %v155 = vsub.f32 %v23, %v154
    %v156 = vand.u32 %v155, 4294901760
    %v157 = vsub.f32 %v155, %v156
    %v158 = vand.u32 %v157, 4294901760
    %159 = vmatprep.mubr.f32.mxu0 %v158
    %v160 = vand.u32 %v22, 4294901760
    %v161 = vsub.f32 %v22, %v160
    %v162 = vand.u32 %v161, 4294901760
    %v163 = vsub.f32 %v161, %v162
    %v164 = vand.u32 %v163, 4294901760
    %165 = vmatmul.mubr.f32.gmra.mrb[0].mxu0 %v164
    %v166 = vpop.f32.mrb[0].mxu0
    %v167 = vadd.f32 %v57, %v166
    %v168 = vpop.f32.mrb[0].mxu0
    %169 = vdwg.mxu0
    %170 = vmatprep.subr.mxu0 0.0
    %v171 = vand.u32 %v25, 4294901760
    %v172 = vsub.f32 %v25, %v171
    %v173 = vand.u32 %v172, 4294901760
    %v174 = vsub.f32 %v172, %v173
    %v175 = vand.u32 %v174, 4294901760
    %176 = vmatpush1.msra.mxu0 %v175
    %177 = vmatprep.subr.mxu0 0.0
    %v178 = vand.u32 %v26, 4294901760
    %v179 = vsub.f32 %v26, %v178
    %v180 = vand.u32 %v179, 4294901760
    %v181 = vsub.f32 %v179, %v180
    %v182 = vand.u32 %v181, 4294901760
    %183 = vmatpush1.msra.mxu0 %v182
    %184 = vmatprep.subr.mxu0 0.0
    %v185 = vand.u32 %v27, 4294901760
    %v186 = vsub.f32 %v27, %v185
    %v187 = vand.u32 %v186, 4294901760
    %v188 = vsub.f32 %v186, %v187
    %v189 = vand.u32 %v188, 4294901760
    %190 = vmatpush1.msra.mxu0 %v189
    %191 = vmatprep.subr.mxu0 0.0
    %v192 = vand.u32 %v28, 4294901760
    %v193 = vsub.f32 %v28, %v192
    %v194 = vand.u32 %v193, 4294901760
    %v195 = vsub.f32 %v193, %v194
    %v196 = vand.u32 %v195, 4294901760
    %197 = vmatpush1.msra.mxu0 %v196
    %198 = vmatprep.subr.mxu0 0.0
    %v199 = vand.u32 %v29, 4294901760
    %v200 = vsub.f32 %v29, %v199
    %v201 = vand.u32 %v200, 4294901760
    %v202 = vsub.f32 %v200, %v201
    %v203 = vand.u32 %v202, 4294901760
    %204 = vmatpush1.msra.mxu0 %v203
    %205 = vmatprep.subr.mxu0 0.0
    %v206 = vand.u32 %v30, 4294901760
    %v207 = vsub.f32 %v30, %v206
    %v208 = vand.u32 %v207, 4294901760
    %v209 = vsub.f32 %v207, %v208
    %v210 = vand.u32 %v209, 4294901760
    %211 = vmatpush1.msra.mxu0 %v210
    %212 = vmatprep.subr.mxu0 0.0
    %v213 = vand.u32 %v31, 4294901760
    %v214 = vsub.f32 %v31, %v213
    %v215 = vand.u32 %v214, 4294901760
    %v216 = vsub.f32 %v214, %v215
    %v217 = vand.u32 %v216, 4294901760
    %218 = vmatpush1.msra.mxu0 %v217
    %219 = vmatprep.subr.mxu0 0.0
    %v220 = vand.u32 %v32, 4294901760
    %v221 = vsub.f32 %v32, %v220
    %v222 = vand.u32 %v221, 4294901760
    %v223 = vsub.f32 %v221, %v222
    %v224 = vand.u32 %v223, 4294901760
    %225 = vmatpush1.msra.mxu0 %v224
    %226 = vmatprep.subr.mxu0 0.0
    %v227 = vand.u32 %v33, 4294901760
    %v228 = vsub.f32 %v33, %v227
    %v229 = vand.u32 %v228, 4294901760
    %v230 = vsub.f32 %v228, %v229
    %v231 = vand.u32 %v230, 4294901760
    %232 = vmatpush1.msra.mxu0 %v231
    %233 = vmatprep.subr.mxu0 0.0
    %v234 = vand.u32 %v34, 4294901760
    %v235 = vsub.f32 %v34, %v234
    %v236 = vand.u32 %v235, 4294901760
    %v237 = vsub.f32 %v235, %v236
    %v238 = vand.u32 %v237, 4294901760
    %239 = vmatpush1.msra.mxu0 %v238
    %240 = vmatprep.subr.mxu0 0.0
    %v241 = vand.u32 %v35, 4294901760
    %v242 = vsub.f32 %v35, %v241
    %v243 = vand.u32 %v242, 4294901760
    %v244 = vsub.f32 %v242, %v243
    %v245 = vand.u32 %v244, 4294901760
    %246 = vmatpush1.msra.mxu0 %v245
    %247 = vmatprep.subr.mxu0 0.0
    %v248 = vand.u32 %v36, 4294901760
    %v249 = vsub.f32 %v36, %v248
    %v250 = vand.u32 %v249, 4294901760
    %v251 = vsub.f32 %v249, %v250
    %v252 = vand.u32 %v251, 4294901760
    %253 = vmatpush1.msra.mxu0 %v252
    %254 = vmatprep.subr.mxu0 0.0
    %v255 = vand.u32 %v37, 4294901760
    %v256 = vsub.f32 %v37, %v255
    %v257 = vand.u32 %v256, 4294901760
    %v258 = vsub.f32 %v256, %v257
    %v259 = vand.u32 %v258, 4294901760
    %260 = vmatpush1.msra.mxu0 %v259
    %261 = vmatprep.subr.mxu0 0.0
    %v262 = vand.u32 %v38, 4294901760
    %v263 = vsub.f32 %v38, %v262
    %v264 = vand.u32 %v263, 4294901760
    %v265 = vsub.f32 %v263, %v264
    %v266 = vand.u32 %v265, 4294901760
    %267 = vmatpush1.msra.mxu0 %v266
    %268 = vmatprep.subr.mxu0 0.0
    %v269 = vand.u32 %v39, 4294901760
    %v270 = vsub.f32 %v39, %v269
    %v271 = vand.u32 %v270, 4294901760
    %v272 = vsub.f32 %v270, %v271
    %v273 = vand.u32 %v272, 4294901760
    %274 = vmatpush1.msra.mxu0 %v273
    %275 = vmatprep.subr.mxu0 0.0
    %v276 = vand.u32 %v40, 4294901760
    %v277 = vsub.f32 %v40, %v276
    %v278 = vand.u32 %v277, 4294901760
    %v279 = vsub.f32 %v277, %v278
    %v280 = vand.u32 %v279, 4294901760
    %281 = vmatpush1.msra.mxu0 %v280
    %282 = vmatprep.subr.mxu0 0.0
    %v283 = vand.u32 %v41, 4294901760
    %v284 = vsub.f32 %v41, %v283
    %v285 = vand.u32 %v284, 4294901760
    %v286 = vsub.f32 %v284, %v285
    %v287 = vand.u32 %v286, 4294901760
    %288 = vmatpush1.msra.mxu0 %v287
    %289 = vmatprep.subr.mxu0 0.0
    %v290 = vand.u32 %v42, 4294901760
    %v291 = vsub.f32 %v42, %v290
    %v292 = vand.u32 %v291, 4294901760
    %v293 = vsub.f32 %v291, %v292
    %v294 = vand.u32 %v293, 4294901760
    %295 = vmatpush1.msra.mxu0 %v294
    %296 = vmatprep.subr.mxu0 0.0
    %v297 = vand.u32 %v43, 4294901760
    %v298 = vsub.f32 %v43, %v297
    %v299 = vand.u32 %v298, 4294901760
    %v300 = vsub.f32 %v298, %v299
    %v301 = vand.u32 %v300, 4294901760
    %302 = vmatpush1.msra.mxu0 %v301
    %303 = vmatprep.subr.mxu0 0.0
    %v304 = vand.u32 %v44, 4294901760
    %v305 = vsub.f32 %v44, %v304
    %v306 = vand.u32 %v305, 4294901760
    %v307 = vsub.f32 %v305, %v306
    %v308 = vand.u32 %v307, 4294901760
    %309 = vmatpush1.msra.mxu0 %v308
    %310 = vmatprep.subr.mxu0 0.0
    %v311 = vand.u32 %v45, 4294901760
    %v312 = vsub.f32 %v45, %v311
    %v313 = vand.u32 %v312, 4294901760
    %v314 = vsub.f32 %v312, %v313
    %v315 = vand.u32 %v314, 4294901760
    %316 = vmatpush1.msra.mxu0 %v315
    %317 = vmatprep.subr.mxu0 0.0
    %v318 = vand.u32 %v46, 4294901760
    %v319 = vsub.f32 %v46, %v318
    %v320 = vand.u32 %v319, 4294901760
    %v321 = vsub.f32 %v319, %v320
    %v322 = vand.u32 %v321, 4294901760
    %323 = vmatpush1.msra.mxu0 %v322
    %324 = vmatprep.subr.mxu0 0.0
    %v325 = vand.u32 %v47, 4294901760
    %v326 = vsub.f32 %v47, %v325
    %v327 = vand.u32 %v326, 4294901760
    %v328 = vsub.f32 %v326, %v327
    %v329 = vand.u32 %v328, 4294901760
    %330 = vmatpush1.msra.mxu0 %v329
    %331 = vmatprep.subr.mxu0 0.0
    %v332 = vand.u32 %v48, 4294901760
    %v333 = vsub.f32 %v48, %v332
    %v334 = vand.u32 %v333, 4294901760
    %v335 = vsub.f32 %v333, %v334
    %v336 = vand.u32 %v335, 4294901760
    %337 = vmatpush1.msra.mxu0 %v336
    %338 = vmatprep.subr.mxu0 0.0
    %v339 = vand.u32 %v49, 4294901760
    %v340 = vsub.f32 %v49, %v339
    %v341 = vand.u32 %v340, 4294901760
    %v342 = vsub.f32 %v340, %v341
    %v343 = vand.u32 %v342, 4294901760
    %344 = vmatpush1.msra.mxu0 %v343
    %345 = vmatprep.subr.mxu0 0.0
    %v346 = vand.u32 %v50, 4294901760
    %v347 = vsub.f32 %v50, %v346
    %v348 = vand.u32 %v347, 4294901760
    %v349 = vsub.f32 %v347, %v348
    %v350 = vand.u32 %v349, 4294901760
    %351 = vmatpush1.msra.mxu0 %v350
    %352 = vmatprep.subr.mxu0 0.0
    %v353 = vand.u32 %v51, 4294901760
    %v354 = vsub.f32 %v51, %v353
    %v355 = vand.u32 %v354, 4294901760
    %v356 = vsub.f32 %v354, %v355
    %v357 = vand.u32 %v356, 4294901760
    %358 = vmatpush1.msra.mxu0 %v357
    %359 = vmatprep.subr.mxu0 0.0
    %v360 = vand.u32 %v52, 4294901760
    %v361 = vsub.f32 %v52, %v360
    %v362 = vand.u32 %v361, 4294901760
    %v363 = vsub.f32 %v361, %v362
    %v364 = vand.u32 %v363, 4294901760
    %365 = vmatpush1.msra.mxu0 %v364
    %366 = vmatprep.subr.mxu0 0.0
    %v367 = vand.u32 %v53, 4294901760
    %v368 = vsub.f32 %v53, %v367
    %v369 = vand.u32 %v368, 4294901760
    %v370 = vsub.f32 %v368, %v369
    %v371 = vand.u32 %v370, 4294901760
    %372 = vmatpush1.msra.mxu0 %v371
    %373 = vmatprep.subr.mxu0 0.0
    %v374 = vand.u32 %v54, 4294901760
    %v375 = vsub.f32 %v54, %v374
    %v376 = vand.u32 %v375, 4294901760
    %v377 = vsub.f32 %v375, %v376
    %v378 = vand.u32 %v377, 4294901760
    %379 = vmatpush1.msra.mxu0 %v378
    %380 = vmatprep.subr.mxu0 0.0
    %v381 = vand.u32 %v55, 4294901760
    %v382 = vsub.f32 %v55, %v381
    %v383 = vand.u32 %v382, 4294901760
    %v384 = vsub.f32 %v382, %v383
    %v385 = vand.u32 %v384, 4294901760
    %386 = vmatpush1.msra.mxu0 %v385
    %387 = vmatprep.subr.mxu0 0.0
    %v388 = vand.u32 %v56, 4294901760
    %v389 = vsub.f32 %v56, %v388
    %v390 = vand.u32 %v389, 4294901760
    %v391 = vsub.f32 %v389, %v390
    %v392 = vand.u32 %v391, 4294901760
    %393 = vmatpush1.msra.mxu0 %v392
    %v394 = vand.u32 %v23, 4294901760
    %395 = vmatprep.mubr.f32.mxu0 %v394
    %v396 = vand.u32 %v22, 4294901760
    %397 = vmatmul.mubr.f32.gmra.mrb[0].mxu0 %v396
    %v398 = vpop.f32.mrb[0].mxu0
    %v399 = vadd.f32 %v167, %v398
    %v400 = vpop.f32.mrb[0].mxu0
    %401 = vdwg.mxu0
    %402 = vmatprep.subr.mxu0 0.0
    %v403 = vand.u32 %v25, 4294901760
    %v404 = vsub.f32 %v25, %v403
    %405 = vmatpush1.msra.mxu0 %v404
    %406 = vmatprep.subr.mxu0 0.0
    %v407 = vand.u32 %v26, 4294901760
    %v408 = vsub.f32 %v26, %v407
    %409 = vmatpush1.msra.mxu0 %v408
    %410 = vmatprep.subr.mxu0 0.0
    %v411 = vand.u32 %v27, 4294901760
    %v412 = vsub.f32 %v27, %v411
    %413 = vmatpush1.msra.mxu0 %v412
    %414 = vmatprep.subr.mxu0 0.0
    %v415 = vand.u32 %v28, 4294901760
    %v416 = vsub.f32 %v28, %v415
    %417 = vmatpush1.msra.mxu0 %v416
    %418 = vmatprep.subr.mxu0 0.0
    %v419 = vand.u32 %v29, 4294901760
    %v420 = vsub.f32 %v29, %v419
    %421 = vmatpush1.msra.mxu0 %v420
    %422 = vmatprep.subr.mxu0 0.0
    %v423 = vand.u32 %v30, 4294901760
    %v424 = vsub.f32 %v30, %v423
    %425 = vmatpush1.msra.mxu0 %v424
    %426 = vmatprep.subr.mxu0 0.0
    %v427 = vand.u32 %v31, 4294901760
    %v428 = vsub.f32 %v31, %v427
    %429 = vmatpush1.msra.mxu0 %v428
    %430 = vmatprep.subr.mxu0 0.0
    %v431 = vand.u32 %v32, 4294901760
    %v432 = vsub.f32 %v32, %v431
    %433 = vmatpush1.msra.mxu0 %v432
    %434 = vmatprep.subr.mxu0 0.0
    %v435 = vand.u32 %v33, 4294901760
    %v436 = vsub.f32 %v33, %v435
    %437 = vmatpush1.msra.mxu0 %v436
    %438 = vmatprep.subr.mxu0 0.0
    %v439 = vand.u32 %v34, 4294901760
    %v440 = vsub.f32 %v34, %v439
    %441 = vmatpush1.msra.mxu0 %v440
    %442 = vmatprep.subr.mxu0 0.0
    %v443 = vand.u32 %v35, 4294901760
    %v444 = vsub.f32 %v35, %v443
    %445 = vmatpush1.msra.mxu0 %v444
    %446 = vmatprep.subr.mxu0 0.0
    %v447 = vand.u32 %v36, 4294901760
    %v448 = vsub.f32 %v36, %v447
    %449 = vmatpush1.msra.mxu0 %v448
    %450 = vmatprep.subr.mxu0 0.0
    %v451 = vand.u32 %v37, 4294901760
    %v452 = vsub.f32 %v37, %v451
    %453 = vmatpush1.msra.mxu0 %v452
    %454 = vmatprep.subr.mxu0 0.0
    %v455 = vand.u32 %v38, 4294901760
    %v456 = vsub.f32 %v38, %v455
    %457 = vmatpush1.msra.mxu0 %v456
    %458 = vmatprep.subr.mxu0 0.0
    %v459 = vand.u32 %v39, 4294901760
    %v460 = vsub.f32 %v39, %v459
    %461 = vmatpush1.msra.mxu0 %v460
    %462 = vmatprep.subr.mxu0 0.0
    %v463 = vand.u32 %v40, 4294901760
    %v464 = vsub.f32 %v40, %v463
    %465 = vmatpush1.msra.mxu0 %v464
    %466 = vmatprep.subr.mxu0 0.0
    %v467 = vand.u32 %v41, 4294901760
    %v468 = vsub.f32 %v41, %v467
    %469 = vmatpush1.msra.mxu0 %v468
    %470 = vmatprep.subr.mxu0 0.0
    %v471 = vand.u32 %v42, 4294901760
    %v472 = vsub.f32 %v42, %v471
    %473 = vmatpush1.msra.mxu0 %v472
    %474 = vmatprep.subr.mxu0 0.0
    %v475 = vand.u32 %v43, 4294901760
    %v476 = vsub.f32 %v43, %v475
    %477 = vmatpush1.msra.mxu0 %v476
    %478 = vmatprep.subr.mxu0 0.0
    %v479 = vand.u32 %v44, 4294901760
    %v480 = vsub.f32 %v44, %v479
    %481 = vmatpush1.msra.mxu0 %v480
    %482 = vmatprep.subr.mxu0 0.0
    %v483 = vand.u32 %v45, 4294901760
    %v484 = vsub.f32 %v45, %v483
    %485 = vmatpush1.msra.mxu0 %v484
    %486 = vmatprep.subr.mxu0 0.0
    %v487 = vand.u32 %v46, 4294901760
    %v488 = vsub.f32 %v46, %v487
    %489 = vmatpush1.msra.mxu0 %v488
    %490 = vmatprep.subr.mxu0 0.0
    %v491 = vand.u32 %v47, 4294901760
    %v492 = vsub.f32 %v47, %v491
    %493 = vmatpush1.msra.mxu0 %v492
    %494 = vmatprep.subr.mxu0 0.0
    %v495 = vand.u32 %v48, 4294901760
    %v496 = vsub.f32 %v48, %v495
    %497 = vmatpush1.msra.mxu0 %v496
    %498 = vmatprep.subr.mxu0 0.0
    %v499 = vand.u32 %v49, 4294901760
    %v500 = vsub.f32 %v49, %v499
    %501 = vmatpush1.msra.mxu0 %v500
    %502 = vmatprep.subr.mxu0 0.0
    %v503 = vand.u32 %v50, 4294901760
    %v504 = vsub.f32 %v50, %v503
    %505 = vmatpush1.msra.mxu0 %v504
    %506 = vmatprep.subr.mxu0 0.0
    %v507 = vand.u32 %v51, 4294901760
    %v508 = vsub.f32 %v51, %v507
    %509 = vmatpush1.msra.mxu0 %v508
    %510 = vmatprep.subr.mxu0 0.0
    %v511 = vand.u32 %v52, 4294901760
    %v512 = vsub.f32 %v52, %v511
    %513 = vmatpush1.msra.mxu0 %v512
    %514 = vmatprep.subr.mxu0 0.0
    %v515 = vand.u32 %v53, 4294901760
    %v516 = vsub.f32 %v53, %v515
    %517 = vmatpush1.msra.mxu0 %v516
    %518 = vmatprep.subr.mxu0 0.0
    %v519 = vand.u32 %v54, 4294901760
    %v520 = vsub.f32 %v54, %v519
    %521 = vmatpush1.msra.mxu0 %v520
    %522 = vmatprep.subr.mxu0 0.0
    %v523 = vand.u32 %v55, 4294901760
    %v524 = vsub.f32 %v55, %v523
    %525 = vmatpush1.msra.mxu0 %v524
    %526 = vmatprep.subr.mxu0 0.0
    %v527 = vand.u32 %v56, 4294901760
    %v528 = vsub.f32 %v56, %v527
    %529 = vmatpush1.msra.mxu0 %v528
    %v530 = vand.u32 %v23, 4294901760
    %v531 = vsub.f32 %v23, %v530
    %532 = vmatprep.mubr.f32.mxu0 %v531
    %v533 = vand.u32 %v22, 4294901760
    %v534 = vsub.f32 %v22, %v533
    %535 = vmatmul.mubr.f32.gmra.mrb[0].mxu0 %v534
    %v536 = vpop.f32.mrb[0].mxu0
    %v537 = vadd.f32 %v399, %v536
    %v538 = vpop.f32.mrb[0].mxu0
    %539 = vdwg.mxu0
    %540 = vmatprep.subr.mxu0 0.0
    %v541 = vand.u32 %v25, 4294901760
    %542 = vmatpush1.msra.mxu0 %v541
    %543 = vmatprep.subr.mxu0 0.0
    %v544 = vand.u32 %v26, 4294901760
    %545 = vmatpush1.msra.mxu0 %v544
    %546 = vmatprep.subr.mxu0 0.0
    %v547 = vand.u32 %v27, 4294901760
    %548 = vmatpush1.msra.mxu0 %v547
    %549 = vmatprep.subr.mxu0 0.0
    %v550 = vand.u32 %v28, 4294901760
    %551 = vmatpush1.msra.mxu0 %v550
    %552 = vmatprep.subr.mxu0 0.0
    %v553 = vand.u32 %v29, 4294901760
    %554 = vmatpush1.msra.mxu0 %v553
    %555 = vmatprep.subr.mxu0 0.0
    %v556 = vand.u32 %v30, 4294901760
    %557 = vmatpush1.msra.mxu0 %v556
    %558 = vmatprep.subr.mxu0 0.0
    %v559 = vand.u32 %v31, 4294901760
    %560 = vmatpush1.msra.mxu0 %v559
    %561 = vmatprep.subr.mxu0 0.0
    %v562 = vand.u32 %v32, 4294901760
    %563 = vmatpush1.msra.mxu0 %v562
    %564 = vmatprep.subr.mxu0 0.0
    %v565 = vand.u32 %v33, 4294901760
    %566 = vmatpush1.msra.mxu0 %v565
    %567 = vmatprep.subr.mxu0 0.0
    %v568 = vand.u32 %v34, 4294901760
    %569 = vmatpush1.msra.mxu0 %v568
    %570 = vmatprep.subr.mxu0 0.0
    %v571 = vand.u32 %v35, 4294901760
    %572 = vmatpush1.msra.mxu0 %v571
    %573 = vmatprep.subr.mxu0 0.0
    %v574 = vand.u32 %v36, 4294901760
    %575 = vmatpush1.msra.mxu0 %v574
    %576 = vmatprep.subr.mxu0 0.0
    %v577 = vand.u32 %v37, 4294901760
    %578 = vmatpush1.msra.mxu0 %v577
    %579 = vmatprep.subr.mxu0 0.0
    %v580 = vand.u32 %v38, 4294901760
    %581 = vmatpush1.msra.mxu0 %v580
    %582 = vmatprep.subr.mxu0 0.0
    %v583 = vand.u32 %v39, 4294901760
    %584 = vmatpush1.msra.mxu0 %v583
    %585 = vmatprep.subr.mxu0 0.0
    %v586 = vand.u32 %v40, 4294901760
    %587 = vmatpush1.msra.mxu0 %v586
    %588 = vmatprep.subr.mxu0 0.0
    %v589 = vand.u32 %v41, 4294901760
    %590 = vmatpush1.msra.mxu0 %v589
    %591 = vmatprep.subr.mxu0 0.0
    %v592 = vand.u32 %v42, 4294901760
    %593 = vmatpush1.msra.mxu0 %v592
    %594 = vmatprep.subr.mxu0 0.0
    %v595 = vand.u32 %v43, 4294901760
    %596 = vmatpush1.msra.mxu0 %v595
    %597 = vmatprep.subr.mxu0 0.0
    %v598 = vand.u32 %v44, 4294901760
    %599 = vmatpush1.msra.mxu0 %v598
    %600 = vmatprep.subr.mxu0 0.0
    %v601 = vand.u32 %v45, 4294901760
    %602 = vmatpush1.msra.mxu0 %v601
    %603 = vmatprep.subr.mxu0 0.0
    %v604 = vand.u32 %v46, 4294901760
    %605 = vmatpush1.msra.mxu0 %v604
    %606 = vmatprep.subr.mxu0 0.0
    %v607 = vand.u32 %v47, 4294901760
    %608 = vmatpush1.msra.mxu0 %v607
    %609 = vmatprep.subr.mxu0 0.0
    %v610 = vand.u32 %v48, 4294901760
    %611 = vmatpush1.msra.mxu0 %v610
    %612 = vmatprep.subr.mxu0 0.0
    %v613 = vand.u32 %v49, 4294901760
    %614 = vmatpush1.msra.mxu0 %v613
    %615 = vmatprep.subr.mxu0 0.0
    %v616 = vand.u32 %v50, 4294901760
    %617 = vmatpush1.msra.mxu0 %v616
    %618 = vmatprep.subr.mxu0 0.0
    %v619 = vand.u32 %v51, 4294901760
    %620 = vmatpush1.msra.mxu0 %v619
    %621 = vmatprep.subr.mxu0 0.0
    %v622 = vand.u32 %v52, 4294901760
    %623 = vmatpush1.msra.mxu0 %v622
    %624 = vmatprep.subr.mxu0 0.0
    %v625 = vand.u32 %v53, 4294901760
    %626 = vmatpush1.msra.mxu0 %v625
    %627 = vmatprep.subr.mxu0 0.0
    %v628 = vand.u32 %v54, 4294901760
    %629 = vmatpush1.msra.mxu0 %v628
    %630 = vmatprep.subr.mxu0 0.0
    %v631 = vand.u32 %v55, 4294901760
    %632 = vmatpush1.msra.mxu0 %v631
    %633 = vmatprep.subr.mxu0 0.0
    %v634 = vand.u32 %v56, 4294901760
    %635 = vmatpush1.msra.mxu0 %v634
    %v636 = vand.u32 %v23, 4294901760
    %v637 = vsub.f32 %v23, %v636
    %v638 = vand.u32 %v637, 4294901760
    %639 = vmatprep.mubr.f32.mxu0 %v638
    %v640 = vand.u32 %v22, 4294901760
    %v641 = vsub.f32 %v22, %v640
    %v642 = vand.u32 %v641, 4294901760
    %643 = vmatmul.mubr.f32.gmra.mrb[0].mxu0 %v642
    %v644 = vpop.f32.mrb[0].mxu0
    %v645 = vadd.f32 %v537, %v644
    %v646 = vpop.f32.mrb[0].mxu0
    %647 = vdwg.mxu0
    %648 = vmatprep.subr.mxu0 0.0
    %v649 = vand.u32 %v25, 4294901760
    %v650 = vsub.f32 %v25, %v649
    %v651 = vand.u32 %v650, 4294901760
    %652 = vmatpush1.msra.mxu0 %v651
    %653 = vmatprep.subr.mxu0 0.0
    %v654 = vand.u32 %v26, 4294901760
    %v655 = vsub.f32 %v26, %v654
    %v656 = vand.u32 %v655, 4294901760
    %657 = vmatpush1.msra.mxu0 %v656
    %658 = vmatprep.subr.mxu0 0.0
    %v659 = vand.u32 %v27, 4294901760
    %v660 = vsub.f32 %v27, %v659
    %v661 = vand.u32 %v660, 4294901760
    %662 = vmatpush1.msra.mxu0 %v661
    %663 = vmatprep.subr.mxu0 0.0
    %v664 = vand.u32 %v28, 4294901760
    %v665 = vsub.f32 %v28, %v664
    %v666 = vand.u32 %v665, 4294901760
    %667 = vmatpush1.msra.mxu0 %v666
    %668 = vmatprep.subr.mxu0 0.0
    %v669 = vand.u32 %v29, 4294901760
    %v670 = vsub.f32 %v29, %v669
    %v671 = vand.u32 %v670, 4294901760
    %672 = vmatpush1.msra.mxu0 %v671
    %673 = vmatprep.subr.mxu0 0.0
    %v674 = vand.u32 %v30, 4294901760
    %v675 = vsub.f32 %v30, %v674
    %v676 = vand.u32 %v675, 4294901760
    %677 = vmatpush1.msra.mxu0 %v676
    %678 = vmatprep.subr.mxu0 0.0
    %v679 = vand.u32 %v31, 4294901760
    %v680 = vsub.f32 %v31, %v679
    %v681 = vand.u32 %v680, 4294901760
    %682 = vmatpush1.msra.mxu0 %v681
    %683 = vmatprep.subr.mxu0 0.0
    %v684 = vand.u32 %v32, 4294901760
    %v685 = vsub.f32 %v32, %v684
    %v686 = vand.u32 %v685, 4294901760
    %687 = vmatpush1.msra.mxu0 %v686
    %688 = vmatprep.subr.mxu0 0.0
    %v689 = vand.u32 %v33, 4294901760
    %v690 = vsub.f32 %v33, %v689
    %v691 = vand.u32 %v690, 4294901760
    %692 = vmatpush1.msra.mxu0 %v691
    %693 = vmatprep.subr.mxu0 0.0
    %v694 = vand.u32 %v34, 4294901760
    %v695 = vsub.f32 %v34, %v694
    %v696 = vand.u32 %v695, 4294901760
    %697 = vmatpush1.msra.mxu0 %v696
    %698 = vmatprep.subr.mxu0 0.0
    %v699 = vand.u32 %v35, 4294901760
    %v700 = vsub.f32 %v35, %v699
    %v701 = vand.u32 %v700, 4294901760
    %702 = vmatpush1.msra.mxu0 %v701
    %703 = vmatprep.subr.mxu0 0.0
    %v704 = vand.u32 %v36, 4294901760
    %v705 = vsub.f32 %v36, %v704
    %v706 = vand.u32 %v705, 4294901760
    %707 = vmatpush1.msra.mxu0 %v706
    %708 = vmatprep.subr.mxu0 0.0
    %v709 = vand.u32 %v37, 4294901760
    %v710 = vsub.f32 %v37, %v709
    %v711 = vand.u32 %v710, 4294901760
    %712 = vmatpush1.msra.mxu0 %v711
    %713 = vmatprep.subr.mxu0 0.0
    %v714 = vand.u32 %v38, 4294901760
    %v715 = vsub.f32 %v38, %v714
    %v716 = vand.u32 %v715, 4294901760
    %717 = vmatpush1.msra.mxu0 %v716
    %718 = vmatprep.subr.mxu0 0.0
    %v719 = vand.u32 %v39, 4294901760
    %v720 = vsub.f32 %v39, %v719
    %v721 = vand.u32 %v720, 4294901760
    %722 = vmatpush1.msra.mxu0 %v721
    %723 = vmatprep.subr.mxu0 0.0
    %v724 = vand.u32 %v40, 4294901760
    %v725 = vsub.f32 %v40, %v724
    %v726 = vand.u32 %v725, 4294901760
    %727 = vmatpush1.msra.mxu0 %v726
    %728 = vmatprep.subr.mxu0 0.0
    %v729 = vand.u32 %v41, 4294901760
    %v730 = vsub.f32 %v41, %v729
    %v731 = vand.u32 %v730, 4294901760
    %732 = vmatpush1.msra.mxu0 %v731
    %733 = vmatprep.subr.mxu0 0.0
    %v734 = vand.u32 %v42, 4294901760
    %v735 = vsub.f32 %v42, %v734
    %v736 = vand.u32 %v735, 4294901760
    %737 = vmatpush1.msra.mxu0 %v736
    %738 = vmatprep.subr.mxu0 0.0
    %v739 = vand.u32 %v43, 4294901760
    %v740 = vsub.f32 %v43, %v739
    %v741 = vand.u32 %v740, 4294901760
    %742 = vmatpush1.msra.mxu0 %v741
    %743 = vmatprep.subr.mxu0 0.0
    %v744 = vand.u32 %v44, 4294901760
    %v745 = vsub.f32 %v44, %v744
    %v746 = vand.u32 %v745, 4294901760
    %747 = vmatpush1.msra.mxu0 %v746
    %748 = vmatprep.subr.mxu0 0.0
    %v749 = vand.u32 %v45, 4294901760
    %v750 = vsub.f32 %v45, %v749
    %v751 = vand.u32 %v750, 4294901760
    %752 = vmatpush1.msra.mxu0 %v751
    %753 = vmatprep.subr.mxu0 0.0
    %v754 = vand.u32 %v46, 4294901760
    %v755 = vsub.f32 %v46, %v754
    %v756 = vand.u32 %v755, 4294901760
    %757 = vmatpush1.msra.mxu0 %v756
    %758 = vmatprep.subr.mxu0 0.0
    %v759 = vand.u32 %v47, 4294901760
    %v760 = vsub.f32 %v47, %v759
    %v761 = vand.u32 %v760, 4294901760
    %762 = vmatpush1.msra.mxu0 %v761
    %763 = vmatprep.subr.mxu0 0.0
    %v764 = vand.u32 %v48, 4294901760
    %v765 = vsub.f32 %v48, %v764
    %v766 = vand.u32 %v765, 4294901760
    %767 = vmatpush1.msra.mxu0 %v766
    %768 = vmatprep.subr.mxu0 0.0
    %v769 = vand.u32 %v49, 4294901760
    %v770 = vsub.f32 %v49, %v769
    %v771 = vand.u32 %v770, 4294901760
    %772 = vmatpush1.msra.mxu0 %v771
    %773 = vmatprep.subr.mxu0 0.0
    %v774 = vand.u32 %v50, 4294901760
    %v775 = vsub.f32 %v50, %v774
    %v776 = vand.u32 %v775, 4294901760
    %777 = vmatpush1.msra.mxu0 %v776
    %778 = vmatprep.subr.mxu0 0.0
    %v779 = vand.u32 %v51, 4294901760
    %v780 = vsub.f32 %v51, %v779
    %v781 = vand.u32 %v780, 4294901760
    %782 = vmatpush1.msra.mxu0 %v781
    %783 = vmatprep.subr.mxu0 0.0
    %v784 = vand.u32 %v52, 4294901760
    %v785 = vsub.f32 %v52, %v784
    %v786 = vand.u32 %v785, 4294901760
    %787 = vmatpush1.msra.mxu0 %v786
    %788 = vmatprep.subr.mxu0 0.0
    %v789 = vand.u32 %v53, 4294901760
    %v790 = vsub.f32 %v53, %v789
    %v791 = vand.u32 %v790, 4294901760
    %792 = vmatpush1.msra.mxu0 %v791
    %793 = vmatprep.subr.mxu0 0.0
    %v794 = vand.u32 %v54, 4294901760
    %v795 = vsub.f32 %v54, %v794
    %v796 = vand.u32 %v795, 4294901760
    %797 = vmatpush1.msra.mxu0 %v796
    %798 = vmatprep.subr.mxu0 0.0
    %v799 = vand.u32 %v55, 4294901760
    %v800 = vsub.f32 %v55, %v799
    %v801 = vand.u32 %v800, 4294901760
    %802 = vmatpush1.msra.mxu0 %v801
    %803 = vmatprep.subr.mxu0 0.0
    %v804 = vand.u32 %v56, 4294901760
    %v805 = vsub.f32 %v56, %v804
    %v806 = vand.u32 %v805, 4294901760
    %807 = vmatpush1.msra.mxu0 %v806
    %v808 = vand.u32 %v23, 4294901760
    %809 = vmatprep.mubr.f32.mxu0 %v808
    %v810 = vand.u32 %v22, 4294901760
    %811 = vmatmul.mubr.f32.gmra.mrb[0].mxu0 %v810
    %v812 = vpop.f32.mrb[0].mxu0
    %v813 = vadd.f32 %v645, %v812
    %v814 = vpop.f32.mrb[0].mxu0
    %815 = vdwg.mxu0
    %816 = vmatprep.subr.mxu0 0.0
    %v817 = vand.u32 %v25, 4294901760
    %818 = vmatpush1.msra.mxu0 %v817
    %819 = vmatprep.subr.mxu0 0.0
    %v820 = vand.u32 %v26, 4294901760
    %821 = vmatpush1.msra.mxu0 %v820
    %822 = vmatprep.subr.mxu0 0.0
    %v823 = vand.u32 %v27, 4294901760
    %824 = vmatpush1.msra.mxu0 %v823
    %825 = vmatprep.subr.mxu0 0.0
    %v826 = vand.u32 %v28, 4294901760
    %827 = vmatpush1.msra.mxu0 %v826
    %828 = vmatprep.subr.mxu0 0.0
    %v829 = vand.u32 %v29, 4294901760
    %830 = vmatpush1.msra.mxu0 %v829
    %831 = vmatprep.subr.mxu0 0.0
    %v832 = vand.u32 %v30, 4294901760
    %833 = vmatpush1.msra.mxu0 %v832
    %834 = vmatprep.subr.mxu0 0.0
    %v835 = vand.u32 %v31, 4294901760
    %836 = vmatpush1.msra.mxu0 %v835
    %837 = vmatprep.subr.mxu0 0.0
    %v838 = vand.u32 %v32, 4294901760
    %839 = vmatpush1.msra.mxu0 %v838
    %840 = vmatprep.subr.mxu0 0.0
    %v841 = vand.u32 %v33, 4294901760
    %842 = vmatpush1.msra.mxu0 %v841
    %843 = vmatprep.subr.mxu0 0.0
    %v844 = vand.u32 %v34, 4294901760
    %845 = vmatpush1.msra.mxu0 %v844
    %846 = vmatprep.subr.mxu0 0.0
    %v847 = vand.u32 %v35, 4294901760
    %848 = vmatpush1.msra.mxu0 %v847
    %849 = vmatprep.subr.mxu0 0.0
    %v850 = vand.u32 %v36, 4294901760
    %851 = vmatpush1.msra.mxu0 %v850
    %852 = vmatprep.subr.mxu0 0.0
    %v853 = vand.u32 %v37, 4294901760
    %854 = vmatpush1.msra.mxu0 %v853
    %855 = vmatprep.subr.mxu0 0.0
    %v856 = vand.u32 %v38, 4294901760
    %857 = vmatpush1.msra.mxu0 %v856
    %858 = vmatprep.subr.mxu0 0.0
    %v859 = vand.u32 %v39, 4294901760
    %860 = vmatpush1.msra.mxu0 %v859
    %861 = vmatprep.subr.mxu0 0.0
    %v862 = vand.u32 %v40, 4294901760
    %863 = vmatpush1.msra.mxu0 %v862
    %864 = vmatprep.subr.mxu0 0.0
    %v865 = vand.u32 %v41, 4294901760
    %866 = vmatpush1.msra.mxu0 %v865
    %867 = vmatprep.subr.mxu0 0.0
    %v868 = vand.u32 %v42, 4294901760
    %869 = vmatpush1.msra.mxu0 %v868
    %870 = vmatprep.subr.mxu0 0.0
    %v871 = vand.u32 %v43, 4294901760
    %872 = vmatpush1.msra.mxu0 %v871
    %873 = vmatprep.subr.mxu0 0.0
    %v874 = vand.u32 %v44, 4294901760
    %875 = vmatpush1.msra.mxu0 %v874
    %876 = vmatprep.subr.mxu0 0.0
    %v877 = vand.u32 %v45, 4294901760
    %878 = vmatpush1.msra.mxu0 %v877
    %879 = vmatprep.subr.mxu0 0.0
    %v880 = vand.u32 %v46, 4294901760
    %881 = vmatpush1.msra.mxu0 %v880
    %882 = vmatprep.subr.mxu0 0.0
    %v883 = vand.u32 %v47, 4294901760
    %884 = vmatpush1.msra.mxu0 %v883
    %885 = vmatprep.subr.mxu0 0.0
    %v886 = vand.u32 %v48, 4294901760
    %887 = vmatpush1.msra.mxu0 %v886
    %888 = vmatprep.subr.mxu0 0.0
    %v889 = vand.u32 %v49, 4294901760
    %890 = vmatpush1.msra.mxu0 %v889
    %891 = vmatprep.subr.mxu0 0.0
    %v892 = vand.u32 %v50, 4294901760
    %893 = vmatpush1.msra.mxu0 %v892
    %894 = vmatprep.subr.mxu0 0.0
    %v895 = vand.u32 %v51, 4294901760
    %896 = vmatpush1.msra.mxu0 %v895
    %897 = vmatprep.subr.mxu0 0.0
    %v898 = vand.u32 %v52, 4294901760
    %899 = vmatpush1.msra.mxu0 %v898
    %900 = vmatprep.subr.mxu0 0.0
    %v901 = vand.u32 %v53, 4294901760
    %902 = vmatpush1.msra.mxu0 %v901
    %903 = vmatprep.subr.mxu0 0.0
    %v904 = vand.u32 %v54, 4294901760
    %905 = vmatpush1.msra.mxu0 %v904
    %906 = vmatprep.subr.mxu0 0.0
    %v907 = vand.u32 %v55, 4294901760
    %908 = vmatpush1.msra.mxu0 %v907
    %909 = vmatprep.subr.mxu0 0.0
    %v910 = vand.u32 %v56, 4294901760
    %911 = vmatpush1.msra.mxu0 %v910
    %v912 = vand.u32 %v23, 4294901760
    %913 = vmatprep.mubr.f32.mxu0 %v912
    %v914 = vand.u32 %v22, 4294901760
    %915 = vmatmul.mubr.f32.gmra.mrb[0].mxu0 %v914
    %v916 = vpop.f32.mrb[0].mxu0
    %v917 = vadd.f32 %v813, %v916
    %v918 = vpop.f32.mrb[0].mxu0
    %919 = vdwg.mxu0
    %vm920 = vcmask 64512
    %v921 = vsel %vm920, %v917, -inf
    %922 = vmax.xlane.f32.xlu0 %v921
    %v923 = vpop.xlane.xlu0 %922
    %v924 = vsub.f32 %v917, %v923
    %v925 = vmul.f32 %v924, 1.442695
    %v926 = vpow.pop %v925
    %v927 = vsel %vm920, %v926, 0.0
    %928 = vadd.xlane.f32.xlu0 %v927
    %v929 = vpop.xlane.xlu0 %928
    %v930 = vrcp.pop %v929
    %v931 = vmul.f32 1.0, %v930
    %v932 = vld [vmem:[%s2] sm:$0xff]
    %v933 = vld [vmem:[%s2 + $0x8] sm:$0xff]
    %v935 = vsel %vm920, %v926, 0
    %v937 = vand.u32 %v933, 4294901760
    %938 = vmatprep.subr.mxu0 %v937
    %v939 = vand.u32 %v932, 4294901760
    %940 = vmatpush1.msra.mxu0 %v939
    %941 = vmatprep.subr.mxu0 0.0
    %942 = vmatpush1.msra.mxu0 0.0
    %943 = vmatprep.subr.mxu0 0.0
    %944 = vmatpush1.msra.mxu0 0.0
    %945 = vmatprep.subr.mxu0 0.0
    %946 = vmatpush1.msra.mxu0 0.0
    %947 = vmatprep.subr.mxu0 0.0
    %948 = vmatpush1.msra.mxu0 0.0
    %949 = vmatprep.subr.mxu0 0.0
    %950 = vmatpush1.msra.mxu0 0.0
    %951 = vmatprep.subr.mxu0 0.0
    %952 = vmatpush1.msra.mxu0 0.0
    %953 = vmatprep.subr.mxu0 0.0
    %954 = vmatpush1.msra.mxu0 0.0
    %955 = vmatprep.subr.mxu0 0.0
    %956 = vmatpush1.msra.mxu0 0.0
    %957 = vmatprep.subr.mxu0 0.0
    %958 = vmatpush1.msra.mxu0 0.0
    %959 = vmatprep.subr.mxu0 0.0
    %960 = vmatpush1.msra.mxu0 0.0
    %961 = vmatprep.subr.mxu0 0.0
    %962 = vmatpush1.msra.mxu0 0.0
    %963 = vmatprep.subr.mxu0 0.0
    %964 = vmatpush1.msra.mxu0 0.0
    %965 = vmatprep.subr.mxu0 0.0
    %966 = vmatpush1.msra.mxu0 0.0
    %967 = vmatprep.subr.mxu0 0.0
    %968 = vmatpush1.msra.mxu0 0.0
    %969 = vmatprep.subr.mxu0 0.0
    %970 = vmatpush1.msra.mxu0 0.0
    %971 = vmatprep.subr.mxu0 0.0
    %972 = vmatpush1.msra.mxu0 0.0
    %973 = vmatprep.subr.mxu0 0.0
    %974 = vmatpush1.msra.mxu0 0.0
    %975 = vmatprep.subr.mxu0 0.0
    %976 = vmatpush1.msra.mxu0 0.0
    %977 = vmatprep.subr.mxu0 0.0
    %978 = vmatpush1.msra.mxu0 0.0
    %979 = vmatprep.subr.mxu0 0.0
    %980 = vmatpush1.msra.mxu0 0.0
    %981 = vmatprep.subr.mxu0 0.0
    %982 = vmatpush1.msra.mxu0 0.0
    %983 = vmatprep.subr.mxu0 0.0
    %984 = vmatpush1.msra.mxu0 0.0
    %985 = vmatprep.subr.mxu0 0.0
    %986 = vmatpush1.msra.mxu0 0.0
    %987 = vmatprep.subr.mxu0 0.0
    %988 = vmatpush1.msra.mxu0 0.0
    %989 = vmatprep.subr.mxu0 0.0
    %990 = vmatpush1.msra.mxu0 0.0
    %991 = vmatprep.subr.mxu0 0.0
    %992 = vmatpush1.msra.mxu0 0.0
    %993 = vmatprep.subr.mxu0 0.0
    %994 = vmatpush1.msra.mxu0 0.0
    %995 = vmatprep.subr.mxu0 0.0
    %996 = vmatpush1.msra.mxu0 0.0
    %997 = vmatprep.subr.mxu0 0.0
    %998 = vmatpush1.msra.mxu0 0.0
    %999 = vmatprep.subr.mxu0 0.0
    %1000 = vmatpush1.msra.mxu0 0.0
    %1001 = vmatprep.subr.mxu0 0.0
    %1002 = vmatpush1.msra.mxu0 0.0
    %1003 = vmatprep.mubr.f32.mxu0 0.0
    %v1004 = vand.u32 %v935, 4294901760
    %v1005 = vsub.f32 %v935, %v1004
    %v1006 = vand.u32 %v1005, 4294901760
    %v1007 = vsub.f32 %v1005, %v1006
    %v1008 = vand.u32 %v1007, 4294901760
    %1009 = vmatmul.mubr.f32.gmra.mrb[0].mxu0 %v1008
    %v1010 = vpop.f32.mrb[0].mxu0
    %v1011 = vadd.f32 0.0, %v1010
    %v1012 = vpop.f32.mrb[0].mxu0
    %v1013 = vadd.f32 0.0, %v1012
    %1014 = vdwg.mxu0
    %v1015 = vand.u32 %v933, 4294901760
    %v1016 = vsub.f32 %v933, %v1015
    %v1017 = vand.u32 %v1016, 4294901760
    %v1018 = vsub.f32 %v1016, %v1017
    %v1019 = vand.u32 %v1018, 4294901760
    %1020 = vmatprep.subr.mxu0 %v1019
    %v1021 = vand.u32 %v932, 4294901760
    %v1022 = vsub.f32 %v932, %v1021
    %v1023 = vand.u32 %v1022, 4294901760
    %v1024 = vsub.f32 %v1022, %v1023
    %v1025 = vand.u32 %v1024, 4294901760
    %1026 = vmatpush1.msra.mxu0 %v1025
    %1027 = vmatprep.subr.mxu0 0.0
    %1028 = vmatpush1.msra.mxu0 0.0
    %1029 = vmatprep.subr.mxu0 0.0
    %1030 = vmatpush1.msra.mxu0 0.0
    %1031 = vmatprep.subr.mxu0 0.0
    %1032 = vmatpush1.msra.mxu0 0.0
    %1033 = vmatprep.subr.mxu0 0.0
    %1034 = vmatpush1.msra.mxu0 0.0
    %1035 = vmatprep.subr.mxu0 0.0
    %1036 = vmatpush1.msra.mxu0 0.0
    %1037 = vmatprep.subr.mxu0 0.0
    %1038 = vmatpush1.msra.mxu0 0.0
    %1039 = vmatprep.subr.mxu0 0.0
    %1040 = vmatpush1.msra.mxu0 0.0
    %1041 = vmatprep.subr.mxu0 0.0
    %1042 = vmatpush1.msra.mxu0 0.0
    %1043 = vmatprep.subr.mxu0 0.0
    %1044 = vmatpush1.msra.mxu0 0.0
    %1045 = vmatprep.subr.mxu0 0.0
    %1046 = vmatpush1.msra.mxu0 0.0
    %1047 = vmatprep.subr.mxu0 0.0
    %1048 = vmatpush1.msra.mxu0 0.0
    %1049 = vmatprep.subr.mxu0 0.0
    %1050 = vmatpush1.msra.mxu0 0.0
    %1051 = vmatprep.subr.mxu0 0.0
    %1052 = vmatpush1.msra.mxu0 0.0
    %1053 = vmatprep.subr.mxu0 0.0
    %1054 = vmatpush1.msra.mxu0 0.0
    %1055 = vmatprep.subr.mxu0 0.0
    %1056 = vmatpush1.msra.mxu0 0.0
    %1057 = vmatprep.subr.mxu0 0.0
    %1058 = vmatpush1.msra.mxu0 0.0
    %1059 = vmatprep.subr.mxu0 0.0
    %1060 = vmatpush1.msra.mxu0 0.0
    %1061 = vmatprep.subr.mxu0 0.0
    %1062 = vmatpush1.msra.mxu0 0.0
    %1063 = vmatprep.subr.mxu0 0.0
    %1064 = vmatpush1.msra.mxu0 0.0
    %1065 = vmatprep.subr.mxu0 0.0
    %1066 = vmatpush1.msra.mxu0 0.0
    %1067 = vmatprep.subr.mxu0 0.0
    %1068 = vmatpush1.msra.mxu0 0.0
    %1069 = vmatprep.subr.mxu0 0.0
    %1070 = vmatpush1.msra.mxu0 0.0
    %1071 = vmatprep.subr.mxu0 0.0
    %1072 = vmatpush1.msra.mxu0 0.0
    %1073 = vmatprep.subr.mxu0 0.0
    %1074 = vmatpush1.msra.mxu0 0.0
    %1075 = vmatprep.subr.mxu0 0.0
    %1076 = vmatpush1.msra.mxu0 0.0
    %1077 = vmatprep.subr.mxu0 0.0
    %1078 = vmatpush1.msra.mxu0 0.0
    %1079 = vmatprep.subr.mxu0 0.0
    %1080 = vmatpush1.msra.mxu0 0.0
    %1081 = vmatprep.subr.mxu0 0.0
    %1082 = vmatpush1.msra.mxu0 0.0
    %1083 = vmatprep.subr.mxu0 0.0
    %1084 = vmatpush1.msra.mxu0 0.0
    %1085 = vmatprep.subr.mxu0 0.0
    %1086 = vmatpush1.msra.mxu0 0.0
    %1087 = vmatprep.subr.mxu0 0.0
    %1088 = vmatpush1.msra.mxu0 0.0
    %1089 = vmatprep.mubr.f32.mxu0 0.0
    %v1090 = vand.u32 %v935, 4294901760
    %1091 = vmatmul.mubr.f32.gmra.mrb[0].mxu0 %v1090
    %v1092 = vpop.f32.mrb[0].mxu0
    %v1093 = vadd.f32 %v1011, %v1092
    %v1094 = vpop.f32.mrb[0].mxu0
    %v1095 = vadd.f32 %v1013, %v1094
    %1096 = vdwg.mxu0
    %v1097 = vand.u32 %v933, 4294901760
    %v1098 = vsub.f32 %v933, %v1097
    %1099 = vmatprep.subr.mxu0 %v1098
    %v1100 = vand.u32 %v932, 4294901760
    %v1101 = vsub.f32 %v932, %v1100
    %1102 = vmatpush1.msra.mxu0 %v1101
    %1103 = vmatprep.subr.mxu0 0.0
    %1104 = vmatpush1.msra.mxu0 0.0
    %1105 = vmatprep.subr.mxu0 0.0
    %1106 = vmatpush1.msra.mxu0 0.0
    %1107 = vmatprep.subr.mxu0 0.0
    %1108 = vmatpush1.msra.mxu0 0.0
    %1109 = vmatprep.subr.mxu0 0.0
    %1110 = vmatpush1.msra.mxu0 0.0
    %1111 = vmatprep.subr.mxu0 0.0
    %1112 = vmatpush1.msra.mxu0 0.0
    %1113 = vmatprep.subr.mxu0 0.0
    %1114 = vmatpush1.msra.mxu0 0.0
    %1115 = vmatprep.subr.mxu0 0.0
    %1116 = vmatpush1.msra.mxu0 0.0
    %1117 = vmatprep.subr.mxu0 0.0
    %1118 = vmatpush1.msra.mxu0 0.0
    %1119 = vmatprep.subr.mxu0 0.0
    %1120 = vmatpush1.msra.mxu0 0.0
    %1121 = vmatprep.subr.mxu0 0.0
    %1122 = vmatpush1.msra.mxu0 0.0
    %1123 = vmatprep.subr.mxu0 0.0
    %1124 = vmatpush1.msra.mxu0 0.0
    %1125 = vmatprep.subr.mxu0 0.0
    %1126 = vmatpush1.msra.mxu0 0.0
    %1127 = vmatprep.subr.mxu0 0.0
    %1128 = vmatpush1.msra.mxu0 0.0
    %1129 = vmatprep.subr.mxu0 0.0
    %1130 = vmatpush1.msra.mxu0 0.0
    %1131 = vmatprep.subr.mxu0 0.0
    %1132 = vmatpush1.msra.mxu0 0.0
    %1133 = vmatprep.subr.mxu0 0.0
    %1134 = vmatpush1.msra.mxu0 0.0
    %1135 = vmatprep.subr.mxu0 0.0
    %1136 = vmatpush1.msra.mxu0 0.0
    %1137 = vmatprep.subr.mxu0 0.0
    %1138 = vmatpush1.msra.mxu0 0.0
    %1139 = vmatprep.subr.mxu0 0.0
    %1140 = vmatpush1.msra.mxu0 0.0
    %1141 = vmatprep.subr.mxu0 0.0
    %1142 = vmatpush1.msra.mxu0 0.0
    %1143 = vmatprep.subr.mxu0 0.0
    %1144 = vmatpush1.msra.mxu0 0.0
    %1145 = vmatprep.subr.mxu0 0.0
    %1146 = vmatpush1.msra.mxu0 0.0
    %1147 = vmatprep.subr.mxu0 0.0
    %1148 = vmatpush1.msra.mxu0 0.0
    %1149 = vmatprep.subr.mxu0 0.0
    %1150 = vmatpush1.msra.mxu0 0.0
    %1151 = vmatprep.subr.mxu0 0.0
    %1152 = vmatpush1.msra.mxu0 0.0
    %1153 = vmatprep.subr.mxu0 0.0
    %1154 = vmatpush1.msra.mxu0 0.0
    %1155 = vmatprep.subr.mxu0 0.0
    %1156 = vmatpush1.msra.mxu0 0.0
    %1157 = vmatprep.subr.mxu0 0.0
    %1158 = vmatpush1.msra.mxu0 0.0
    %1159 = vmatprep.subr.mxu0 0.0
    %1160 = vmatpush1.msra.mxu0 0.0
    %1161 = vmatprep.subr.mxu0 0.0
    %1162 = vmatpush1.msra.mxu0 0.0
    %1163 = vmatprep.subr.mxu0 0.0
    %1164 = vmatpush1.msra.mxu0 0.0
    %1165 = vmatprep.mubr.f32.mxu0 0.0
    %v1166 = vand.u32 %v935, 4294901760
    %v1167 = vsub.f32 %v935, %v1166
    %1168 = vmatmul.mubr.f32.gmra.mrb[0].mxu0 %v1167
    %v1169 = vpop.f32.mrb[0].mxu0
    %v1170 = vadd.f32 %v1093, %v1169
    %v1171 = vpop.f32.mrb[0].mxu0
    %v1172 = vadd.f32 %v1095, %v1171
    %1173 = vdwg.mxu0
    %v1174 = vand.u32 %v933, 4294901760
    %1175 = vmatprep.subr.mxu0 %v1174
    %v1176 = vand.u32 %v932, 4294901760
    %1177 = vmatpush1.msra.mxu0 %v1176
    %1178 = vmatprep.subr.mxu0 0.0
    %1179 = vmatpush1.msra.mxu0 0.0
    %1180 = vmatprep.subr.mxu0 0.0
    %1181 = vmatpush1.msra.mxu0 0.0
    %1182 = vmatprep.subr.mxu0 0.0
    %1183 = vmatpush1.msra.mxu0 0.0
    %1184 = vmatprep.subr.mxu0 0.0
    %1185 = vmatpush1.msra.mxu0 0.0
    %1186 = vmatprep.subr.mxu0 0.0
    %1187 = vmatpush1.msra.mxu0 0.0
    %1188 = vmatprep.subr.mxu0 0.0
    %1189 = vmatpush1.msra.mxu0 0.0
    %1190 = vmatprep.subr.mxu0 0.0
    %1191 = vmatpush1.msra.mxu0 0.0
    %1192 = vmatprep.subr.mxu0 0.0
    %1193 = vmatpush1.msra.mxu0 0.0
    %1194 = vmatprep.subr.mxu0 0.0
    %1195 = vmatpush1.msra.mxu0 0.0
    %1196 = vmatprep.subr.mxu0 0.0
    %1197 = vmatpush1.msra.mxu0 0.0
    %1198 = vmatprep.subr.mxu0 0.0
    %1199 = vmatpush1.msra.mxu0 0.0
    %1200 = vmatprep.subr.mxu0 0.0
    %1201 = vmatpush1.msra.mxu0 0.0
    %1202 = vmatprep.subr.mxu0 0.0
    %1203 = vmatpush1.msra.mxu0 0.0
    %1204 = vmatprep.subr.mxu0 0.0
    %1205 = vmatpush1.msra.mxu0 0.0
    %1206 = vmatprep.subr.mxu0 0.0
    %1207 = vmatpush1.msra.mxu0 0.0
    %1208 = vmatprep.subr.mxu0 0.0
    %1209 = vmatpush1.msra.mxu0 0.0
    %1210 = vmatprep.subr.mxu0 0.0
    %1211 = vmatpush1.msra.mxu0 0.0
    %1212 = vmatprep.subr.mxu0 0.0
    %1213 = vmatpush1.msra.mxu0 0.0
    %1214 = vmatprep.subr.mxu0 0.0
    %1215 = vmatpush1.msra.mxu0 0.0
    %1216 = vmatprep.subr.mxu0 0.0
    %1217 = vmatpush1.msra.mxu0 0.0
    %1218 = vmatprep.subr.mxu0 0.0
    %1219 = vmatpush1.msra.mxu0 0.0
    %1220 = vmatprep.subr.mxu0 0.0
    %1221 = vmatpush1.msra.mxu0 0.0
    %1222 = vmatprep.subr.mxu0 0.0
    %1223 = vmatpush1.msra.mxu0 0.0
    %1224 = vmatprep.subr.mxu0 0.0
    %1225 = vmatpush1.msra.mxu0 0.0
    %1226 = vmatprep.subr.mxu0 0.0
    %1227 = vmatpush1.msra.mxu0 0.0
    %1228 = vmatprep.subr.mxu0 0.0
    %1229 = vmatpush1.msra.mxu0 0.0
    %1230 = vmatprep.subr.mxu0 0.0
    %1231 = vmatpush1.msra.mxu0 0.0
    %1232 = vmatprep.subr.mxu0 0.0
    %1233 = vmatpush1.msra.mxu0 0.0
    %1234 = vmatprep.subr.mxu0 0.0
    %1235 = vmatpush1.msra.mxu0 0.0
    %1236 = vmatprep.subr.mxu0 0.0
    %1237 = vmatpush1.msra.mxu0 0.0
    %1238 = vmatprep.subr.mxu0 0.0
    %1239 = vmatpush1.msra.mxu0 0.0
    %1240 = vmatprep.mubr.f32.mxu0 0.0
    %v1241 = vand.u32 %v935, 4294901760
    %v1242 = vsub.f32 %v935, %v1241
    %v1243 = vand.u32 %v1242, 4294901760
    %1244 = vmatmul.mubr.f32.gmra.mrb[0].mxu0 %v1243
    %v1245 = vpop.f32.mrb[0].mxu0
    %v1246 = vadd.f32 %v1170, %v1245
    %v1247 = vpop.f32.mrb[0].mxu0
    %v1248 = vadd.f32 %v1172, %v1247
    %1249 = vdwg.mxu0
    %v1250 = vand.u32 %v933, 4294901760
    %v1251 = vsub.f32 %v933, %v1250
    %v1252 = vand.u32 %v1251, 4294901760
    %1253 = vmatprep.subr.mxu0 %v1252
    %v1254 = vand.u32 %v932, 4294901760
    %v1255 = vsub.f32 %v932, %v1254
    %v1256 = vand.u32 %v1255, 4294901760
    %1257 = vmatpush1.msra.mxu0 %v1256
    %1258 = vmatprep.subr.mxu0 0.0
    %1259 = vmatpush1.msra.mxu0 0.0
    %1260 = vmatprep.subr.mxu0 0.0
    %1261 = vmatpush1.msra.mxu0 0.0
    %1262 = vmatprep.subr.mxu0 0.0
    %1263 = vmatpush1.msra.mxu0 0.0
    %1264 = vmatprep.subr.mxu0 0.0
    %1265 = vmatpush1.msra.mxu0 0.0
    %1266 = vmatprep.subr.mxu0 0.0
    %1267 = vmatpush1.msra.mxu0 0.0
    %1268 = vmatprep.subr.mxu0 0.0
    %1269 = vmatpush1.msra.mxu0 0.0
    %1270 = vmatprep.subr.mxu0 0.0
    %1271 = vmatpush1.msra.mxu0 0.0
    %1272 = vmatprep.subr.mxu0 0.0
    %1273 = vmatpush1.msra.mxu0 0.0
    %1274 = vmatprep.subr.mxu0 0.0
    %1275 = vmatpush1.msra.mxu0 0.0
    %1276 = vmatprep.subr.mxu0 0.0
    %1277 = vmatpush1.msra.mxu0 0.0
    %1278 = vmatprep.subr.mxu0 0.0
    %1279 = vmatpush1.msra.mxu0 0.0
    %1280 = vmatprep.subr.mxu0 0.0
    %1281 = vmatpush1.msra.mxu0 0.0
    %1282 = vmatprep.subr.mxu0 0.0
    %1283 = vmatpush1.msra.mxu0 0.0
    %1284 = vmatprep.subr.mxu0 0.0
    %1285 = vmatpush1.msra.mxu0 0.0
    %1286 = vmatprep.subr.mxu0 0.0
    %1287 = vmatpush1.msra.mxu0 0.0
    %1288 = vmatprep.subr.mxu0 0.0
    %1289 = vmatpush1.msra.mxu0 0.0
    %1290 = vmatprep.subr.mxu0 0.0
    %1291 = vmatpush1.msra.mxu0 0.0
    %1292 = vmatprep.subr.mxu0 0.0
    %1293 = vmatpush1.msra.mxu0 0.0
    %1294 = vmatprep.subr.mxu0 0.0
    %1295 = vmatpush1.msra.mxu0 0.0
    %1296 = vmatprep.subr.mxu0 0.0
    %1297 = vmatpush1.msra.mxu0 0.0
    %1298 = vmatprep.subr.mxu0 0.0
    %1299 = vmatpush1.msra.mxu0 0.0
    %1300 = vmatprep.subr.mxu0 0.0
    %1301 = vmatpush1.msra.mxu0 0.0
    %1302 = vmatprep.subr.mxu0 0.0
    %1303 = vmatpush1.msra.mxu0 0.0
    %1304 = vmatprep.subr.mxu0 0.0
    %1305 = vmatpush1.msra.mxu0 0.0
    %1306 = vmatprep.subr.mxu0 0.0
    %1307 = vmatpush1.msra.mxu0 0.0
    %1308 = vmatprep.subr.mxu0 0.0
    %1309 = vmatpush1.msra.mxu0 0.0
    %1310 = vmatprep.subr.mxu0 0.0
    %1311 = vmatpush1.msra.mxu0 0.0
    %1312 = vmatprep.subr.mxu0 0.0
    %1313 = vmatpush1.msra.mxu0 0.0
    %1314 = vmatprep.subr.mxu0 0.0
    %1315 = vmatpush1.msra.mxu0 0.0
    %1316 = vmatprep.subr.mxu0 0.0
    %1317 = vmatpush1.msra.mxu0 0.0
    %1318 = vmatprep.subr.mxu0 0.0
    %1319 = vmatpush1.msra.mxu0 0.0
    %1320 = vmatprep.mubr.f32.mxu0 0.0
    %v1321 = vand.u32 %v935, 4294901760
    %1322 = vmatmul.mubr.f32.gmra.mrb[0].mxu0 %v1321
    %v1323 = vpop.f32.mrb[0].mxu0
    %v1324 = vadd.f32 %v1246, %v1323
    %v1325 = vpop.f32.mrb[0].mxu0
    %v1326 = vadd.f32 %v1248, %v1325
    %1327 = vdwg.mxu0
    %v1328 = vand.u32 %v933, 4294901760
    %1329 = vmatprep.subr.mxu0 %v1328
    %v1330 = vand.u32 %v932, 4294901760
    %1331 = vmatpush1.msra.mxu0 %v1330
    %1332 = vmatprep.subr.mxu0 0.0
    %1333 = vmatpush1.msra.mxu0 0.0
    %1334 = vmatprep.subr.mxu0 0.0
    %1335 = vmatpush1.msra.mxu0 0.0
    %1336 = vmatprep.subr.mxu0 0.0
    %1337 = vmatpush1.msra.mxu0 0.0
    %1338 = vmatprep.subr.mxu0 0.0
    %1339 = vmatpush1.msra.mxu0 0.0
    %1340 = vmatprep.subr.mxu0 0.0
    %1341 = vmatpush1.msra.mxu0 0.0
    %1342 = vmatprep.subr.mxu0 0.0
    %1343 = vmatpush1.msra.mxu0 0.0
    %1344 = vmatprep.subr.mxu0 0.0
    %1345 = vmatpush1.msra.mxu0 0.0
    %1346 = vmatprep.subr.mxu0 0.0
    %1347 = vmatpush1.msra.mxu0 0.0
    %1348 = vmatprep.subr.mxu0 0.0
    %1349 = vmatpush1.msra.mxu0 0.0
    %1350 = vmatprep.subr.mxu0 0.0
    %1351 = vmatpush1.msra.mxu0 0.0
    %1352 = vmatprep.subr.mxu0 0.0
    %1353 = vmatpush1.msra.mxu0 0.0
    %1354 = vmatprep.subr.mxu0 0.0
    %1355 = vmatpush1.msra.mxu0 0.0
    %1356 = vmatprep.subr.mxu0 0.0
    %1357 = vmatpush1.msra.mxu0 0.0
    %1358 = vmatprep.subr.mxu0 0.0
    %1359 = vmatpush1.msra.mxu0 0.0
    %1360 = vmatprep.subr.mxu0 0.0
    %1361 = vmatpush1.msra.mxu0 0.0
    %1362 = vmatprep.subr.mxu0 0.0
    %1363 = vmatpush1.msra.mxu0 0.0
    %1364 = vmatprep.subr.mxu0 0.0
    %1365 = vmatpush1.msra.mxu0 0.0
    %1366 = vmatprep.subr.mxu0 0.0
    %1367 = vmatpush1.msra.mxu0 0.0
    %1368 = vmatprep.subr.mxu0 0.0
    %1369 = vmatpush1.msra.mxu0 0.0
    %1370 = vmatprep.subr.mxu0 0.0
    %1371 = vmatpush1.msra.mxu0 0.0
    %1372 = vmatprep.subr.mxu0 0.0
    %1373 = vmatpush1.msra.mxu0 0.0
    %1374 = vmatprep.subr.mxu0 0.0
    %1375 = vmatpush1.msra.mxu0 0.0
    %1376 = vmatprep.subr.mxu0 0.0
    %1377 = vmatpush1.msra.mxu0 0.0
    %1378 = vmatprep.subr.mxu0 0.0
    %1379 = vmatpush1.msra.mxu0 0.0
    %1380 = vmatprep.subr.mxu0 0.0
    %1381 = vmatpush1.msra.mxu0 0.0
    %1382 = vmatprep.subr.mxu0 0.0
    %1383 = vmatpush1.msra.mxu0 0.0
    %1384 = vmatprep.subr.mxu0 0.0
    %1385 = vmatpush1.msra.mxu0 0.0
    %1386 = vmatprep.subr.mxu0 0.0
    %1387 = vmatpush1.msra.mxu0 0.0
    %1388 = vmatprep.subr.mxu0 0.0
    %1389 = vmatpush1.msra.mxu0 0.0
    %1390 = vmatprep.subr.mxu0 0.0
    %1391 = vmatpush1.msra.mxu0 0.0
    %1392 = vmatprep.subr.mxu0 0.0
    %1393 = vmatpush1.msra.mxu0 0.0
    %1394 = vmatprep.mubr.f32.mxu0 0.0
    %v1395 = vand.u32 %v935, 4294901760
    %1396 = vmatmul.mubr.f32.gmra.mrb[0].mxu0 %v1395
    %v1397 = vpop.f32.mrb[0].mxu0
    %v1398 = vadd.f32 %v1324, %v1397
    %v1399 = vpop.f32.mrb[0].mxu0
    %v1400 = vadd.f32 %v1326, %v1399
    %1401 = vdwg.mxu0
    %v1402 = vmul.f32 %v1398, %v22
    %v1403 = vmul.f32 %v1400, %v23
    %v1404 = vld [vmem:[%s3] sm:$0xff]
    %v1405 = vld [vmem:[%s3 + $0x8] sm:$0xff]
    %v1406 = vld [vmem:[%s3 + $0x10] sm:$0xff]
    %v1407 = vld [vmem:[%s3 + $0x18] sm:$0xff]
    %v1408 = vld [vmem:[%s3 + $0x20] sm:$0xff]
    %v1409 = vld [vmem:[%s3 + $0x28] sm:$0xff]
    %v1410 = vld [vmem:[%s3 + $0x30] sm:$0xff]
    %v1411 = vld [vmem:[%s3 + $0x38] sm:$0xff]
    %v1412 = vld [vmem:[%s3 + $0x40] sm:$0xff]
    %v1413 = vld [vmem:[%s3 + $0x48] sm:$0xff]
    %v1414 = vld [vmem:[%s3 + $0x50] sm:$0xff]
    %v1415 = vld [vmem:[%s3 + $0x58] sm:$0xff]
    %v1416 = vld [vmem:[%s3 + $0x60] sm:$0xff]
    %v1417 = vld [vmem:[%s3 + $0x68] sm:$0xff]
    %v1418 = vld [vmem:[%s3 + $0x70] sm:$0xff]
    %v1419 = vld [vmem:[%s3 + $0x78] sm:$0xff]
    %v1420 = vld [vmem:[%s3 + $0x80] sm:$0xff]
    %v1421 = vld [vmem:[%s3 + $0x88] sm:$0xff]
    %v1422 = vld [vmem:[%s3 + $0x90] sm:$0xff]
    %v1423 = vld [vmem:[%s3 + $0x98] sm:$0xff]
    %v1424 = vld [vmem:[%s3 + $0xa0] sm:$0xff]
    %v1425 = vld [vmem:[%s3 + $0xa8] sm:$0xff]
    %v1426 = vld [vmem:[%s3 + $0xb0] sm:$0xff]
    %v1427 = vld [vmem:[%s3 + $0xb8] sm:$0xff]
    %v1428 = vld [vmem:[%s3 + $0xc0] sm:$0xff]
    %v1429 = vld [vmem:[%s3 + $0xc8] sm:$0xff]
    %v1430 = vld [vmem:[%s3 + $0xd0] sm:$0xff]
    %v1431 = vld [vmem:[%s3 + $0xd8] sm:$0xff]
    %v1432 = vld [vmem:[%s3 + $0xe0] sm:$0xff]
    %v1433 = vld [vmem:[%s3 + $0xe8] sm:$0xff]
    %v1434 = vld [vmem:[%s3 + $0xf0] sm:$0xff]
    %v1435 = vld [vmem:[%s3 + $0xf8] sm:$0xff]
    %1436 = vmatprep.subr.mxu0 0.0
    %v1437 = vand.u32 %v1404, 4294901760
    %1438 = vmatpush1.msra.mxu0 %v1437
    %1439 = vmatprep.subr.mxu0 0.0
    %v1440 = vand.u32 %v1405, 4294901760
    %1441 = vmatpush1.msra.mxu0 %v1440
    %1442 = vmatprep.subr.mxu0 0.0
    %v1443 = vand.u32 %v1406, 4294901760
    %1444 = vmatpush1.msra.mxu0 %v1443
    %1445 = vmatprep.subr.mxu0 0.0
    %v1446 = vand.u32 %v1407, 4294901760
    %1447 = vmatpush1.msra.mxu0 %v1446
    %1448 = vmatprep.subr.mxu0 0.0
    %v1449 = vand.u32 %v1408, 4294901760
    %1450 = vmatpush1.msra.mxu0 %v1449
    %1451 = vmatprep.subr.mxu0 0.0
    %v1452 = vand.u32 %v1409, 4294901760
    %1453 = vmatpush1.msra.mxu0 %v1452
    %1454 = vmatprep.subr.mxu0 0.0
    %v1455 = vand.u32 %v1410, 4294901760
    %1456 = vmatpush1.msra.mxu0 %v1455
    %1457 = vmatprep.subr.mxu0 0.0
    %v1458 = vand.u32 %v1411, 4294901760
    %1459 = vmatpush1.msra.mxu0 %v1458
    %1460 = vmatprep.subr.mxu0 0.0
    %v1461 = vand.u32 %v1412, 4294901760
    %1462 = vmatpush1.msra.mxu0 %v1461
    %1463 = vmatprep.subr.mxu0 0.0
    %v1464 = vand.u32 %v1413, 4294901760
    %1465 = vmatpush1.msra.mxu0 %v1464
    %1466 = vmatprep.subr.mxu0 0.0
    %v1467 = vand.u32 %v1414, 4294901760
    %1468 = vmatpush1.msra.mxu0 %v1467
    %1469 = vmatprep.subr.mxu0 0.0
    %v1470 = vand.u32 %v1415, 4294901760
    %1471 = vmatpush1.msra.mxu0 %v1470
    %1472 = vmatprep.subr.mxu0 0.0
    %v1473 = vand.u32 %v1416, 4294901760
    %1474 = vmatpush1.msra.mxu0 %v1473
    %1475 = vmatprep.subr.mxu0 0.0
    %v1476 = vand.u32 %v1417, 4294901760
    %1477 = vmatpush1.msra.mxu0 %v1476
    %1478 = vmatprep.subr.mxu0 0.0
    %v1479 = vand.u32 %v1418, 4294901760
    %1480 = vmatpush1.msra.mxu0 %v1479
    %1481 = vmatprep.subr.mxu0 0.0
    %v1482 = vand.u32 %v1419, 4294901760
    %1483 = vmatpush1.msra.mxu0 %v1482
    %1484 = vmatprep.subr.mxu0 0.0
    %v1485 = vand.u32 %v1420, 4294901760
    %1486 = vmatpush1.msra.mxu0 %v1485
    %1487 = vmatprep.subr.mxu0 0.0
    %v1488 = vand.u32 %v1421, 4294901760
    %1489 = vmatpush1.msra.mxu0 %v1488
    %1490 = vmatprep.subr.mxu0 0.0
    %v1491 = vand.u32 %v1422, 4294901760
    %1492 = vmatpush1.msra.mxu0 %v1491
    %1493 = vmatprep.subr.mxu0 0.0
    %v1494 = vand.u32 %v1423, 4294901760
    %1495 = vmatpush1.msra.mxu0 %v1494
    %1496 = vmatprep.subr.mxu0 0.0
    %v1497 = vand.u32 %v1424, 4294901760
    %1498 = vmatpush1.msra.mxu0 %v1497
    %1499 = vmatprep.subr.mxu0 0.0
    %v1500 = vand.u32 %v1425, 4294901760
    %1501 = vmatpush1.msra.mxu0 %v1500
    %1502 = vmatprep.subr.mxu0 0.0
    %v1503 = vand.u32 %v1426, 4294901760
    %1504 = vmatpush1.msra.mxu0 %v1503
    %1505 = vmatprep.subr.mxu0 0.0
    %v1506 = vand.u32 %v1427, 4294901760
    %1507 = vmatpush1.msra.mxu0 %v1506
    %1508 = vmatprep.subr.mxu0 0.0
    %v1509 = vand.u32 %v1428, 4294901760
    %1510 = vmatpush1.msra.mxu0 %v1509
    %1511 = vmatprep.subr.mxu0 0.0
    %v1512 = vand.u32 %v1429, 4294901760
    %1513 = vmatpush1.msra.mxu0 %v1512
    %1514 = vmatprep.subr.mxu0 0.0
    %v1515 = vand.u32 %v1430, 4294901760
    %1516 = vmatpush1.msra.mxu0 %v1515
    %1517 = vmatprep.subr.mxu0 0.0
    %v1518 = vand.u32 %v1431, 4294901760
    %1519 = vmatpush1.msra.mxu0 %v1518
    %1520 = vmatprep.subr.mxu0 0.0
    %v1521 = vand.u32 %v1432, 4294901760
    %1522 = vmatpush1.msra.mxu0 %v1521
    %1523 = vmatprep.subr.mxu0 0.0
    %v1524 = vand.u32 %v1433, 4294901760
    %1525 = vmatpush1.msra.mxu0 %v1524
    %1526 = vmatprep.subr.mxu0 0.0
    %v1527 = vand.u32 %v1434, 4294901760
    %1528 = vmatpush1.msra.mxu0 %v1527
    %1529 = vmatprep.subr.mxu0 0.0
    %v1530 = vand.u32 %v1435, 4294901760
    %1531 = vmatpush1.msra.mxu0 %v1530
    %v1532 = vand.u32 %v1403, 4294901760
    %v1533 = vsub.f32 %v1403, %v1532
    %v1534 = vand.u32 %v1533, 4294901760
    %v1535 = vsub.f32 %v1533, %v1534
    %v1536 = vand.u32 %v1535, 4294901760
    %1537 = vmatprep.mubr.f32.mxu0 %v1536
    %v1538 = vand.u32 %v1402, 4294901760
    %v1539 = vsub.f32 %v1402, %v1538
    %v1540 = vand.u32 %v1539, 4294901760
    %v1541 = vsub.f32 %v1539, %v1540
    %v1542 = vand.u32 %v1541, 4294901760
    %1543 = vmatmul.mubr.f32.gmra.mrb[0].mxu0 %v1542
    %v1544 = vpop.f32.mrb[0].mxu0
    %v1545 = vadd.f32 0.0, %v1544
    %v1546 = vpop.f32.mrb[0].mxu0
    %1547 = vdwg.mxu0
    %1548 = vmatprep.subr.mxu0 0.0
    %v1549 = vand.u32 %v1404, 4294901760
    %v1550 = vsub.f32 %v1404, %v1549
    %v1551 = vand.u32 %v1550, 4294901760
    %v1552 = vsub.f32 %v1550, %v1551
    %v1553 = vand.u32 %v1552, 4294901760
    %1554 = vmatpush1.msra.mxu0 %v1553
    %1555 = vmatprep.subr.mxu0 0.0
    %v1556 = vand.u32 %v1405, 4294901760
    %v1557 = vsub.f32 %v1405, %v1556
    %v1558 = vand.u32 %v1557, 4294901760
    %v1559 = vsub.f32 %v1557, %v1558
    %v1560 = vand.u32 %v1559, 4294901760
    %1561 = vmatpush1.msra.mxu0 %v1560
    %1562 = vmatprep.subr.mxu0 0.0
    %v1563 = vand.u32 %v1406, 4294901760
    %v1564 = vsub.f32 %v1406, %v1563
    %v1565 = vand.u32 %v1564, 4294901760
    %v1566 = vsub.f32 %v1564, %v1565
    %v1567 = vand.u32 %v1566, 4294901760
    %1568 = vmatpush1.msra.mxu0 %v1567
    %1569 = vmatprep.subr.mxu0 0.0
    %v1570 = vand.u32 %v1407, 4294901760
    %v1571 = vsub.f32 %v1407, %v1570
    %v1572 = vand.u32 %v1571, 4294901760
    %v1573 = vsub.f32 %v1571, %v1572
    %v1574 = vand.u32 %v1573, 4294901760
    %1575 = vmatpush1.msra.mxu0 %v1574
    %1576 = vmatprep.subr.mxu0 0.0
    %v1577 = vand.u32 %v1408, 4294901760
    %v1578 = vsub.f32 %v1408, %v1577
    %v1579 = vand.u32 %v1578, 4294901760
    %v1580 = vsub.f32 %v1578, %v1579
    %v1581 = vand.u32 %v1580, 4294901760
    %1582 = vmatpush1.msra.mxu0 %v1581
    %1583 = vmatprep.subr.mxu0 0.0
    %v1584 = vand.u32 %v1409, 4294901760
    %v1585 = vsub.f32 %v1409, %v1584
    %v1586 = vand.u32 %v1585, 4294901760
    %v1587 = vsub.f32 %v1585, %v1586
    %v1588 = vand.u32 %v1587, 4294901760
    %1589 = vmatpush1.msra.mxu0 %v1588
    %1590 = vmatprep.subr.mxu0 0.0
    %v1591 = vand.u32 %v1410, 4294901760
    %v1592 = vsub.f32 %v1410, %v1591
    %v1593 = vand.u32 %v1592, 4294901760
    %v1594 = vsub.f32 %v1592, %v1593
    %v1595 = vand.u32 %v1594, 4294901760
    %1596 = vmatpush1.msra.mxu0 %v1595
    %1597 = vmatprep.subr.mxu0 0.0
    %v1598 = vand.u32 %v1411, 4294901760
    %v1599 = vsub.f32 %v1411, %v1598
    %v1600 = vand.u32 %v1599, 4294901760
    %v1601 = vsub.f32 %v1599, %v1600
    %v1602 = vand.u32 %v1601, 4294901760
    %1603 = vmatpush1.msra.mxu0 %v1602
    %1604 = vmatprep.subr.mxu0 0.0
    %v1605 = vand.u32 %v1412, 4294901760
    %v1606 = vsub.f32 %v1412, %v1605
    %v1607 = vand.u32 %v1606, 4294901760
    %v1608 = vsub.f32 %v1606, %v1607
    %v1609 = vand.u32 %v1608, 4294901760
    %1610 = vmatpush1.msra.mxu0 %v1609
    %1611 = vmatprep.subr.mxu0 0.0
    %v1612 = vand.u32 %v1413, 4294901760
    %v1613 = vsub.f32 %v1413, %v1612
    %v1614 = vand.u32 %v1613, 4294901760
    %v1615 = vsub.f32 %v1613, %v1614
    %v1616 = vand.u32 %v1615, 4294901760
    %1617 = vmatpush1.msra.mxu0 %v1616
    %1618 = vmatprep.subr.mxu0 0.0
    %v1619 = vand.u32 %v1414, 4294901760
    %v1620 = vsub.f32 %v1414, %v1619
    %v1621 = vand.u32 %v1620, 4294901760
    %v1622 = vsub.f32 %v1620, %v1621
    %v1623 = vand.u32 %v1622, 4294901760
    %1624 = vmatpush1.msra.mxu0 %v1623
    %1625 = vmatprep.subr.mxu0 0.0
    %v1626 = vand.u32 %v1415, 4294901760
    %v1627 = vsub.f32 %v1415, %v1626
    %v1628 = vand.u32 %v1627, 4294901760
    %v1629 = vsub.f32 %v1627, %v1628
    %v1630 = vand.u32 %v1629, 4294901760
    %1631 = vmatpush1.msra.mxu0 %v1630
    %1632 = vmatprep.subr.mxu0 0.0
    %v1633 = vand.u32 %v1416, 4294901760
    %v1634 = vsub.f32 %v1416, %v1633
    %v1635 = vand.u32 %v1634, 4294901760
    %v1636 = vsub.f32 %v1634, %v1635
    %v1637 = vand.u32 %v1636, 4294901760
    %1638 = vmatpush1.msra.mxu0 %v1637
    %1639 = vmatprep.subr.mxu0 0.0
    %v1640 = vand.u32 %v1417, 4294901760
    %v1641 = vsub.f32 %v1417, %v1640
    %v1642 = vand.u32 %v1641, 4294901760
    %v1643 = vsub.f32 %v1641, %v1642
    %v1644 = vand.u32 %v1643, 4294901760
    %1645 = vmatpush1.msra.mxu0 %v1644
    %1646 = vmatprep.subr.mxu0 0.0
    %v1647 = vand.u32 %v1418, 4294901760
    %v1648 = vsub.f32 %v1418, %v1647
    %v1649 = vand.u32 %v1648, 4294901760
    %v1650 = vsub.f32 %v1648, %v1649
    %v1651 = vand.u32 %v1650, 4294901760
    %1652 = vmatpush1.msra.mxu0 %v1651
    %1653 = vmatprep.subr.mxu0 0.0
    %v1654 = vand.u32 %v1419, 4294901760
    %v1655 = vsub.f32 %v1419, %v1654
    %v1656 = vand.u32 %v1655, 4294901760
    %v1657 = vsub.f32 %v1655, %v1656
    %v1658 = vand.u32 %v1657, 4294901760
    %1659 = vmatpush1.msra.mxu0 %v1658
    %1660 = vmatprep.subr.mxu0 0.0
    %v1661 = vand.u32 %v1420, 4294901760
    %v1662 = vsub.f32 %v1420, %v1661
    %v1663 = vand.u32 %v1662, 4294901760
    %v1664 = vsub.f32 %v1662, %v1663
    %v1665 = vand.u32 %v1664, 4294901760
    %1666 = vmatpush1.msra.mxu0 %v1665
    %1667 = vmatprep.subr.mxu0 0.0
    %v1668 = vand.u32 %v1421, 4294901760
    %v1669 = vsub.f32 %v1421, %v1668
    %v1670 = vand.u32 %v1669, 4294901760
    %v1671 = vsub.f32 %v1669, %v1670
    %v1672 = vand.u32 %v1671, 4294901760
    %1673 = vmatpush1.msra.mxu0 %v1672
    %1674 = vmatprep.subr.mxu0 0.0
    %v1675 = vand.u32 %v1422, 4294901760
    %v1676 = vsub.f32 %v1422, %v1675
    %v1677 = vand.u32 %v1676, 4294901760
    %v1678 = vsub.f32 %v1676, %v1677
    %v1679 = vand.u32 %v1678, 4294901760
    %1680 = vmatpush1.msra.mxu0 %v1679
    %1681 = vmatprep.subr.mxu0 0.0
    %v1682 = vand.u32 %v1423, 4294901760
    %v1683 = vsub.f32 %v1423, %v1682
    %v1684 = vand.u32 %v1683, 4294901760
    %v1685 = vsub.f32 %v1683, %v1684
    %v1686 = vand.u32 %v1685, 4294901760
    %1687 = vmatpush1.msra.mxu0 %v1686
    %1688 = vmatprep.subr.mxu0 0.0
    %v1689 = vand.u32 %v1424, 4294901760
    %v1690 = vsub.f32 %v1424, %v1689
    %v1691 = vand.u32 %v1690, 4294901760
    %v1692 = vsub.f32 %v1690, %v1691
    %v1693 = vand.u32 %v1692, 4294901760
    %1694 = vmatpush1.msra.mxu0 %v1693
    %1695 = vmatprep.subr.mxu0 0.0
    %v1696 = vand.u32 %v1425, 4294901760
    %v1697 = vsub.f32 %v1425, %v1696
    %v1698 = vand.u32 %v1697, 4294901760
    %v1699 = vsub.f32 %v1697, %v1698
    %v1700 = vand.u32 %v1699, 4294901760
    %1701 = vmatpush1.msra.mxu0 %v1700
    %1702 = vmatprep.subr.mxu0 0.0
    %v1703 = vand.u32 %v1426, 4294901760
    %v1704 = vsub.f32 %v1426, %v1703
    %v1705 = vand.u32 %v1704, 4294901760
    %v1706 = vsub.f32 %v1704, %v1705
    %v1707 = vand.u32 %v1706, 4294901760
    %1708 = vmatpush1.msra.mxu0 %v1707
    %1709 = vmatprep.subr.mxu0 0.0
    %v1710 = vand.u32 %v1427, 4294901760
    %v1711 = vsub.f32 %v1427, %v1710
    %v1712 = vand.u32 %v1711, 4294901760
    %v1713 = vsub.f32 %v1711, %v1712
    %v1714 = vand.u32 %v1713, 4294901760
    %1715 = vmatpush1.msra.mxu0 %v1714
    %1716 = vmatprep.subr.mxu0 0.0
    %v1717 = vand.u32 %v1428, 4294901760
    %v1718 = vsub.f32 %v1428, %v1717
    %v1719 = vand.u32 %v1718, 4294901760
    %v1720 = vsub.f32 %v1718, %v1719
    %v1721 = vand.u32 %v1720, 4294901760
    %1722 = vmatpush1.msra.mxu0 %v1721
    %1723 = vmatprep.subr.mxu0 0.0
    %v1724 = vand.u32 %v1429, 4294901760
    %v1725 = vsub.f32 %v1429, %v1724
    %v1726 = vand.u32 %v1725, 4294901760
    %v1727 = vsub.f32 %v1725, %v1726
    %v1728 = vand.u32 %v1727, 4294901760
    %1729 = vmatpush1.msra.mxu0 %v1728
    %1730 = vmatprep.subr.mxu0 0.0
    %v1731 = vand.u32 %v1430, 4294901760
    %v1732 = vsub.f32 %v1430, %v1731
    %v1733 = vand.u32 %v1732, 4294901760
    %v1734 = vsub.f32 %v1732, %v1733
    %v1735 = vand.u32 %v1734, 4294901760
    %1736 = vmatpush1.msra.mxu0 %v1735
    %1737 = vmatprep.subr.mxu0 0.0
    %v1738 = vand.u32 %v1431, 4294901760
    %v1739 = vsub.f32 %v1431, %v1738
    %v1740 = vand.u32 %v1739, 4294901760
    %v1741 = vsub.f32 %v1739, %v1740
    %v1742 = vand.u32 %v1741, 4294901760
    %1743 = vmatpush1.msra.mxu0 %v1742
    %1744 = vmatprep.subr.mxu0 0.0
    %v1745 = vand.u32 %v1432, 4294901760
    %v1746 = vsub.f32 %v1432, %v1745
    %v1747 = vand.u32 %v1746, 4294901760
    %v1748 = vsub.f32 %v1746, %v1747
    %v1749 = vand.u32 %v1748, 4294901760
    %1750 = vmatpush1.msra.mxu0 %v1749
    %1751 = vmatprep.subr.mxu0 0.0
    %v1752 = vand.u32 %v1433, 4294901760
    %v1753 = vsub.f32 %v1433, %v1752
    %v1754 = vand.u32 %v1753, 4294901760
    %v1755 = vsub.f32 %v1753, %v1754
    %v1756 = vand.u32 %v1755, 4294901760
    %1757 = vmatpush1.msra.mxu0 %v1756
    %1758 = vmatprep.subr.mxu0 0.0
    %v1759 = vand.u32 %v1434, 4294901760
    %v1760 = vsub.f32 %v1434, %v1759
    %v1761 = vand.u32 %v1760, 4294901760
    %v1762 = vsub.f32 %v1760, %v1761
    %v1763 = vand.u32 %v1762, 4294901760
    %1764 = vmatpush1.msra.mxu0 %v1763
    %1765 = vmatprep.subr.mxu0 0.0
    %v1766 = vand.u32 %v1435, 4294901760
    %v1767 = vsub.f32 %v1435, %v1766
    %v1768 = vand.u32 %v1767, 4294901760
    %v1769 = vsub.f32 %v1767, %v1768
    %v1770 = vand.u32 %v1769, 4294901760
    %1771 = vmatpush1.msra.mxu0 %v1770
    %v1772 = vand.u32 %v1403, 4294901760
    %1773 = vmatprep.mubr.f32.mxu0 %v1772
    %v1774 = vand.u32 %v1402, 4294901760
    %1775 = vmatmul.mubr.f32.gmra.mrb[0].mxu0 %v1774
    %v1776 = vpop.f32.mrb[0].mxu0
    %v1777 = vadd.f32 %v1545, %v1776
    %v1778 = vpop.f32.mrb[0].mxu0
    %1779 = vdwg.mxu0
    %1780 = vmatprep.subr.mxu0 0.0
    %v1781 = vand.u32 %v1404, 4294901760
    %v1782 = vsub.f32 %v1404, %v1781
    %1783 = vmatpush1.msra.mxu0 %v1782
    %1784 = vmatprep.subr.mxu0 0.0
    %v1785 = vand.u32 %v1405, 4294901760
    %v1786 = vsub.f32 %v1405, %v1785
    %1787 = vmatpush1.msra.mxu0 %v1786
    %1788 = vmatprep.subr.mxu0 0.0
    %v1789 = vand.u32 %v1406, 4294901760
    %v1790 = vsub.f32 %v1406, %v1789
    %1791 = vmatpush1.msra.mxu0 %v1790
    %1792 = vmatprep.subr.mxu0 0.0
    %v1793 = vand.u32 %v1407, 4294901760
    %v1794 = vsub.f32 %v1407, %v1793
    %1795 = vmatpush1.msra.mxu0 %v1794
    %1796 = vmatprep.subr.mxu0 0.0
    %v1797 = vand.u32 %v1408, 4294901760
    %v1798 = vsub.f32 %v1408, %v1797
    %1799 = vmatpush1.msra.mxu0 %v1798
    %1800 = vmatprep.subr.mxu0 0.0
    %v1801 = vand.u32 %v1409, 4294901760
    %v1802 = vsub.f32 %v1409, %v1801
    %1803 = vmatpush1.msra.mxu0 %v1802
    %1804 = vmatprep.subr.mxu0 0.0
    %v1805 = vand.u32 %v1410, 4294901760
    %v1806 = vsub.f32 %v1410, %v1805
    %1807 = vmatpush1.msra.mxu0 %v1806
    %1808 = vmatprep.subr.mxu0 0.0
    %v1809 = vand.u32 %v1411, 4294901760
    %v1810 = vsub.f32 %v1411, %v1809
    %1811 = vmatpush1.msra.mxu0 %v1810
    %1812 = vmatprep.subr.mxu0 0.0
    %v1813 = vand.u32 %v1412, 4294901760
    %v1814 = vsub.f32 %v1412, %v1813
    %1815 = vmatpush1.msra.mxu0 %v1814
    %1816 = vmatprep.subr.mxu0 0.0
    %v1817 = vand.u32 %v1413, 4294901760
    %v1818 = vsub.f32 %v1413, %v1817
    %1819 = vmatpush1.msra.mxu0 %v1818
    %1820 = vmatprep.subr.mxu0 0.0
    %v1821 = vand.u32 %v1414, 4294901760
    %v1822 = vsub.f32 %v1414, %v1821
    %1823 = vmatpush1.msra.mxu0 %v1822
    %1824 = vmatprep.subr.mxu0 0.0
    %v1825 = vand.u32 %v1415, 4294901760
    %v1826 = vsub.f32 %v1415, %v1825
    %1827 = vmatpush1.msra.mxu0 %v1826
    %1828 = vmatprep.subr.mxu0 0.0
    %v1829 = vand.u32 %v1416, 4294901760
    %v1830 = vsub.f32 %v1416, %v1829
    %1831 = vmatpush1.msra.mxu0 %v1830
    %1832 = vmatprep.subr.mxu0 0.0
    %v1833 = vand.u32 %v1417, 4294901760
    %v1834 = vsub.f32 %v1417, %v1833
    %1835 = vmatpush1.msra.mxu0 %v1834
    %1836 = vmatprep.subr.mxu0 0.0
    %v1837 = vand.u32 %v1418, 4294901760
    %v1838 = vsub.f32 %v1418, %v1837
    %1839 = vmatpush1.msra.mxu0 %v1838
    %1840 = vmatprep.subr.mxu0 0.0
    %v1841 = vand.u32 %v1419, 4294901760
    %v1842 = vsub.f32 %v1419, %v1841
    %1843 = vmatpush1.msra.mxu0 %v1842
    %1844 = vmatprep.subr.mxu0 0.0
    %v1845 = vand.u32 %v1420, 4294901760
    %v1846 = vsub.f32 %v1420, %v1845
    %1847 = vmatpush1.msra.mxu0 %v1846
    %1848 = vmatprep.subr.mxu0 0.0
    %v1849 = vand.u32 %v1421, 4294901760
    %v1850 = vsub.f32 %v1421, %v1849
    %1851 = vmatpush1.msra.mxu0 %v1850
    %1852 = vmatprep.subr.mxu0 0.0
    %v1853 = vand.u32 %v1422, 4294901760
    %v1854 = vsub.f32 %v1422, %v1853
    %1855 = vmatpush1.msra.mxu0 %v1854
    %1856 = vmatprep.subr.mxu0 0.0
    %v1857 = vand.u32 %v1423, 4294901760
    %v1858 = vsub.f32 %v1423, %v1857
    %1859 = vmatpush1.msra.mxu0 %v1858
    %1860 = vmatprep.subr.mxu0 0.0
    %v1861 = vand.u32 %v1424, 4294901760
    %v1862 = vsub.f32 %v1424, %v1861
    %1863 = vmatpush1.msra.mxu0 %v1862
    %1864 = vmatprep.subr.mxu0 0.0
    %v1865 = vand.u32 %v1425, 4294901760
    %v1866 = vsub.f32 %v1425, %v1865
    %1867 = vmatpush1.msra.mxu0 %v1866
    %1868 = vmatprep.subr.mxu0 0.0
    %v1869 = vand.u32 %v1426, 4294901760
    %v1870 = vsub.f32 %v1426, %v1869
    %1871 = vmatpush1.msra.mxu0 %v1870
    %1872 = vmatprep.subr.mxu0 0.0
    %v1873 = vand.u32 %v1427, 4294901760
    %v1874 = vsub.f32 %v1427, %v1873
    %1875 = vmatpush1.msra.mxu0 %v1874
    %1876 = vmatprep.subr.mxu0 0.0
    %v1877 = vand.u32 %v1428, 4294901760
    %v1878 = vsub.f32 %v1428, %v1877
    %1879 = vmatpush1.msra.mxu0 %v1878
    %1880 = vmatprep.subr.mxu0 0.0
    %v1881 = vand.u32 %v1429, 4294901760
    %v1882 = vsub.f32 %v1429, %v1881
    %1883 = vmatpush1.msra.mxu0 %v1882
    %1884 = vmatprep.subr.mxu0 0.0
    %v1885 = vand.u32 %v1430, 4294901760
    %v1886 = vsub.f32 %v1430, %v1885
    %1887 = vmatpush1.msra.mxu0 %v1886
    %1888 = vmatprep.subr.mxu0 0.0
    %v1889 = vand.u32 %v1431, 4294901760
    %v1890 = vsub.f32 %v1431, %v1889
    %1891 = vmatpush1.msra.mxu0 %v1890
    %1892 = vmatprep.subr.mxu0 0.0
    %v1893 = vand.u32 %v1432, 4294901760
    %v1894 = vsub.f32 %v1432, %v1893
    %1895 = vmatpush1.msra.mxu0 %v1894
    %1896 = vmatprep.subr.mxu0 0.0
    %v1897 = vand.u32 %v1433, 4294901760
    %v1898 = vsub.f32 %v1433, %v1897
    %1899 = vmatpush1.msra.mxu0 %v1898
    %1900 = vmatprep.subr.mxu0 0.0
    %v1901 = vand.u32 %v1434, 4294901760
    %v1902 = vsub.f32 %v1434, %v1901
    %1903 = vmatpush1.msra.mxu0 %v1902
    %1904 = vmatprep.subr.mxu0 0.0
    %v1905 = vand.u32 %v1435, 4294901760
    %v1906 = vsub.f32 %v1435, %v1905
    %1907 = vmatpush1.msra.mxu0 %v1906
    %v1908 = vand.u32 %v1403, 4294901760
    %v1909 = vsub.f32 %v1403, %v1908
    %1910 = vmatprep.mubr.f32.mxu0 %v1909
    %v1911 = vand.u32 %v1402, 4294901760
    %v1912 = vsub.f32 %v1402, %v1911
    %1913 = vmatmul.mubr.f32.gmra.mrb[0].mxu0 %v1912
    %v1914 = vpop.f32.mrb[0].mxu0
    %v1915 = vadd.f32 %v1777, %v1914
    %v1916 = vpop.f32.mrb[0].mxu0
    %1917 = vdwg.mxu0
    %1918 = vmatprep.subr.mxu0 0.0
    %v1919 = vand.u32 %v1404, 4294901760
    %1920 = vmatpush1.msra.mxu0 %v1919
    %1921 = vmatprep.subr.mxu0 0.0
    %v1922 = vand.u32 %v1405, 4294901760
    %1923 = vmatpush1.msra.mxu0 %v1922
    %1924 = vmatprep.subr.mxu0 0.0
    %v1925 = vand.u32 %v1406, 4294901760
    %1926 = vmatpush1.msra.mxu0 %v1925
    %1927 = vmatprep.subr.mxu0 0.0
    %v1928 = vand.u32 %v1407, 4294901760
    %1929 = vmatpush1.msra.mxu0 %v1928
    %1930 = vmatprep.subr.mxu0 0.0
    %v1931 = vand.u32 %v1408, 4294901760
    %1932 = vmatpush1.msra.mxu0 %v1931
    %1933 = vmatprep.subr.mxu0 0.0
    %v1934 = vand.u32 %v1409, 4294901760
    %1935 = vmatpush1.msra.mxu0 %v1934
    %1936 = vmatprep.subr.mxu0 0.0
    %v1937 = vand.u32 %v1410, 4294901760
    %1938 = vmatpush1.msra.mxu0 %v1937
    %1939 = vmatprep.subr.mxu0 0.0
    %v1940 = vand.u32 %v1411, 4294901760
    %1941 = vmatpush1.msra.mxu0 %v1940
    %1942 = vmatprep.subr.mxu0 0.0
    %v1943 = vand.u32 %v1412, 4294901760
    %1944 = vmatpush1.msra.mxu0 %v1943
    %1945 = vmatprep.subr.mxu0 0.0
    %v1946 = vand.u32 %v1413, 4294901760
    %1947 = vmatpush1.msra.mxu0 %v1946
    %1948 = vmatprep.subr.mxu0 0.0
    %v1949 = vand.u32 %v1414, 4294901760
    %1950 = vmatpush1.msra.mxu0 %v1949
    %1951 = vmatprep.subr.mxu0 0.0
    %v1952 = vand.u32 %v1415, 4294901760
    %1953 = vmatpush1.msra.mxu0 %v1952
    %1954 = vmatprep.subr.mxu0 0.0
    %v1955 = vand.u32 %v1416, 4294901760
    %1956 = vmatpush1.msra.mxu0 %v1955
    %1957 = vmatprep.subr.mxu0 0.0
    %v1958 = vand.u32 %v1417, 4294901760
    %1959 = vmatpush1.msra.mxu0 %v1958
    %1960 = vmatprep.subr.mxu0 0.0
    %v1961 = vand.u32 %v1418, 4294901760
    %1962 = vmatpush1.msra.mxu0 %v1961
    %1963 = vmatprep.subr.mxu0 0.0
    %v1964 = vand.u32 %v1419, 4294901760
    %1965 = vmatpush1.msra.mxu0 %v1964
    %1966 = vmatprep.subr.mxu0 0.0
    %v1967 = vand.u32 %v1420, 4294901760
    %1968 = vmatpush1.msra.mxu0 %v1967
    %1969 = vmatprep.subr.mxu0 0.0
    %v1970 = vand.u32 %v1421, 4294901760
    %1971 = vmatpush1.msra.mxu0 %v1970
    %1972 = vmatprep.subr.mxu0 0.0
    %v1973 = vand.u32 %v1422, 4294901760
    %1974 = vmatpush1.msra.mxu0 %v1973
    %1975 = vmatprep.subr.mxu0 0.0
    %v1976 = vand.u32 %v1423, 4294901760
    %1977 = vmatpush1.msra.mxu0 %v1976
    %1978 = vmatprep.subr.mxu0 0.0
    %v1979 = vand.u32 %v1424, 4294901760
    %1980 = vmatpush1.msra.mxu0 %v1979
    %1981 = vmatprep.subr.mxu0 0.0
    %v1982 = vand.u32 %v1425, 4294901760
    %1983 = vmatpush1.msra.mxu0 %v1982
    %1984 = vmatprep.subr.mxu0 0.0
    %v1985 = vand.u32 %v1426, 4294901760
    %1986 = vmatpush1.msra.mxu0 %v1985
    %1987 = vmatprep.subr.mxu0 0.0
    %v1988 = vand.u32 %v1427, 4294901760
    %1989 = vmatpush1.msra.mxu0 %v1988
    %1990 = vmatprep.subr.mxu0 0.0
    %v1991 = vand.u32 %v1428, 4294901760
    %1992 = vmatpush1.msra.mxu0 %v1991
    %1993 = vmatprep.subr.mxu0 0.0
    %v1994 = vand.u32 %v1429, 4294901760
    %1995 = vmatpush1.msra.mxu0 %v1994
    %1996 = vmatprep.subr.mxu0 0.0
    %v1997 = vand.u32 %v1430, 4294901760
    %1998 = vmatpush1.msra.mxu0 %v1997
    %1999 = vmatprep.subr.mxu0 0.0
    %v2000 = vand.u32 %v1431, 4294901760
    %2001 = vmatpush1.msra.mxu0 %v2000
    %2002 = vmatprep.subr.mxu0 0.0
    %v2003 = vand.u32 %v1432, 4294901760
    %2004 = vmatpush1.msra.mxu0 %v2003
    %2005 = vmatprep.subr.mxu0 0.0
    %v2006 = vand.u32 %v1433, 4294901760
    %2007 = vmatpush1.msra.mxu0 %v2006
    %2008 = vmatprep.subr.mxu0 0.0
    %v2009 = vand.u32 %v1434, 4294901760
    %2010 = vmatpush1.msra.mxu0 %v2009
    %2011 = vmatprep.subr.mxu0 0.0
    %v2012 = vand.u32 %v1435, 4294901760
    %2013 = vmatpush1.msra.mxu0 %v2012
    %v2014 = vand.u32 %v1403, 4294901760
    %v2015 = vsub.f32 %v1403, %v2014
    %v2016 = vand.u32 %v2015, 4294901760
    %2017 = vmatprep.mubr.f32.mxu0 %v2016
    %v2018 = vand.u32 %v1402, 4294901760
    %v2019 = vsub.f32 %v1402, %v2018
    %v2020 = vand.u32 %v2019, 4294901760
    %2021 = vmatmul.mubr.f32.gmra.mrb[0].mxu0 %v2020
    %v2022 = vpop.f32.mrb[0].mxu0
    %v2023 = vadd.f32 %v1915, %v2022
    %v2024 = vpop.f32.mrb[0].mxu0
    %2025 = vdwg.mxu0
    %2026 = vmatprep.subr.mxu0 0.0
    %v2027 = vand.u32 %v1404, 4294901760
    %v2028 = vsub.f32 %v1404, %v2027
    %v2029 = vand.u32 %v2028, 4294901760
    %2030 = vmatpush1.msra.mxu0 %v2029
    %2031 = vmatprep.subr.mxu0 0.0
    %v2032 = vand.u32 %v1405, 4294901760
    %v2033 = vsub.f32 %v1405, %v2032
    %v2034 = vand.u32 %v2033, 4294901760
    %2035 = vmatpush1.msra.mxu0 %v2034
    %2036 = vmatprep.subr.mxu0 0.0
    %v2037 = vand.u32 %v1406, 4294901760
    %v2038 = vsub.f32 %v1406, %v2037
    %v2039 = vand.u32 %v2038, 4294901760
    %2040 = vmatpush1.msra.mxu0 %v2039
    %2041 = vmatprep.subr.mxu0 0.0
    %v2042 = vand.u32 %v1407, 4294901760
    %v2043 = vsub.f32 %v1407, %v2042
    %v2044 = vand.u32 %v2043, 4294901760
    %2045 = vmatpush1.msra.mxu0 %v2044
    %2046 = vmatprep.subr.mxu0 0.0
    %v2047 = vand.u32 %v1408, 4294901760
    %v2048 = vsub.f32 %v1408, %v2047
    %v2049 = vand.u32 %v2048, 4294901760
    %2050 = vmatpush1.msra.mxu0 %v2049
    %2051 = vmatprep.subr.mxu0 0.0
    %v2052 = vand.u32 %v1409, 4294901760
    %v2053 = vsub.f32 %v1409, %v2052
    %v2054 = vand.u32 %v2053, 4294901760
    %2055 = vmatpush1.msra.mxu0 %v2054
    %2056 = vmatprep.subr.mxu0 0.0
    %v2057 = vand.u32 %v1410, 4294901760
    %v2058 = vsub.f32 %v1410, %v2057
    %v2059 = vand.u32 %v2058, 4294901760
    %2060 = vmatpush1.msra.mxu0 %v2059
    %2061 = vmatprep.subr.mxu0 0.0
    %v2062 = vand.u32 %v1411, 4294901760
    %v2063 = vsub.f32 %v1411, %v2062
    %v2064 = vand.u32 %v2063, 4294901760
    %2065 = vmatpush1.msra.mxu0 %v2064
    %2066 = vmatprep.subr.mxu0 0.0
    %v2067 = vand.u32 %v1412, 4294901760
    %v2068 = vsub.f32 %v1412, %v2067
    %v2069 = vand.u32 %v2068, 4294901760
    %2070 = vmatpush1.msra.mxu0 %v2069
    %2071 = vmatprep.subr.mxu0 0.0
    %v2072 = vand.u32 %v1413, 4294901760
    %v2073 = vsub.f32 %v1413, %v2072
    %v2074 = vand.u32 %v2073, 4294901760
    %2075 = vmatpush1.msra.mxu0 %v2074
    %2076 = vmatprep.subr.mxu0 0.0
    %v2077 = vand.u32 %v1414, 4294901760
    %v2078 = vsub.f32 %v1414, %v2077
    %v2079 = vand.u32 %v2078, 4294901760
    %2080 = vmatpush1.msra.mxu0 %v2079
    %2081 = vmatprep.subr.mxu0 0.0
    %v2082 = vand.u32 %v1415, 4294901760
    %v2083 = vsub.f32 %v1415, %v2082
    %v2084 = vand.u32 %v2083, 4294901760
    %2085 = vmatpush1.msra.mxu0 %v2084
    %2086 = vmatprep.subr.mxu0 0.0
    %v2087 = vand.u32 %v1416, 4294901760
    %v2088 = vsub.f32 %v1416, %v2087
    %v2089 = vand.u32 %v2088, 4294901760
    %2090 = vmatpush1.msra.mxu0 %v2089
    %2091 = vmatprep.subr.mxu0 0.0
    %v2092 = vand.u32 %v1417, 4294901760
    %v2093 = vsub.f32 %v1417, %v2092
    %v2094 = vand.u32 %v2093, 4294901760
    %2095 = vmatpush1.msra.mxu0 %v2094
    %2096 = vmatprep.subr.mxu0 0.0
    %v2097 = vand.u32 %v1418, 4294901760
    %v2098 = vsub.f32 %v1418, %v2097
    %v2099 = vand.u32 %v2098, 4294901760
    %2100 = vmatpush1.msra.mxu0 %v2099
    %2101 = vmatprep.subr.mxu0 0.0
    %v2102 = vand.u32 %v1419, 4294901760
    %v2103 = vsub.f32 %v1419, %v2102
    %v2104 = vand.u32 %v2103, 4294901760
    %2105 = vmatpush1.msra.mxu0 %v2104
    %2106 = vmatprep.subr.mxu0 0.0
    %v2107 = vand.u32 %v1420, 4294901760
    %v2108 = vsub.f32 %v1420, %v2107
    %v2109 = vand.u32 %v2108, 4294901760
    %2110 = vmatpush1.msra.mxu0 %v2109
    %2111 = vmatprep.subr.mxu0 0.0
    %v2112 = vand.u32 %v1421, 4294901760
    %v2113 = vsub.f32 %v1421, %v2112
    %v2114 = vand.u32 %v2113, 4294901760
    %2115 = vmatpush1.msra.mxu0 %v2114
    %2116 = vmatprep.subr.mxu0 0.0
    %v2117 = vand.u32 %v1422, 4294901760
    %v2118 = vsub.f32 %v1422, %v2117
    %v2119 = vand.u32 %v2118, 4294901760
    %2120 = vmatpush1.msra.mxu0 %v2119
    %2121 = vmatprep.subr.mxu0 0.0
    %v2122 = vand.u32 %v1423, 4294901760
    %v2123 = vsub.f32 %v1423, %v2122
    %v2124 = vand.u32 %v2123, 4294901760
    %2125 = vmatpush1.msra.mxu0 %v2124
    %2126 = vmatprep.subr.mxu0 0.0
    %v2127 = vand.u32 %v1424, 4294901760
    %v2128 = vsub.f32 %v1424, %v2127
    %v2129 = vand.u32 %v2128, 4294901760
    %2130 = vmatpush1.msra.mxu0 %v2129
    %2131 = vmatprep.subr.mxu0 0.0
    %v2132 = vand.u32 %v1425, 4294901760
    %v2133 = vsub.f32 %v1425, %v2132
    %v2134 = vand.u32 %v2133, 4294901760
    %2135 = vmatpush1.msra.mxu0 %v2134
    %2136 = vmatprep.subr.mxu0 0.0
    %v2137 = vand.u32 %v1426, 4294901760
    %v2138 = vsub.f32 %v1426, %v2137
    %v2139 = vand.u32 %v2138, 4294901760
    %2140 = vmatpush1.msra.mxu0 %v2139
    %2141 = vmatprep.subr.mxu0 0.0
    %v2142 = vand.u32 %v1427, 4294901760
    %v2143 = vsub.f32 %v1427, %v2142
    %v2144 = vand.u32 %v2143, 4294901760
    %2145 = vmatpush1.msra.mxu0 %v2144
    %2146 = vmatprep.subr.mxu0 0.0
    %v2147 = vand.u32 %v1428, 4294901760
    %v2148 = vsub.f32 %v1428, %v2147
    %v2149 = vand.u32 %v2148, 4294901760
    %2150 = vmatpush1.msra.mxu0 %v2149
    %2151 = vmatprep.subr.mxu0 0.0
    %v2152 = vand.u32 %v1429, 4294901760
    %v2153 = vsub.f32 %v1429, %v2152
    %v2154 = vand.u32 %v2153, 4294901760
    %2155 = vmatpush1.msra.mxu0 %v2154
    %2156 = vmatprep.subr.mxu0 0.0
    %v2157 = vand.u32 %v1430, 4294901760
    %v2158 = vsub.f32 %v1430, %v2157
    %v2159 = vand.u32 %v2158, 4294901760
    %2160 = vmatpush1.msra.mxu0 %v2159
    %2161 = vmatprep.subr.mxu0 0.0
    %v2162 = vand.u32 %v1431, 4294901760
    %v2163 = vsub.f32 %v1431, %v2162
    %v2164 = vand.u32 %v2163, 4294901760
    %2165 = vmatpush1.msra.mxu0 %v2164
    %2166 = vmatprep.subr.mxu0 0.0
    %v2167 = vand.u32 %v1432, 4294901760
    %v2168 = vsub.f32 %v1432, %v2167
    %v2169 = vand.u32 %v2168, 4294901760
    %2170 = vmatpush1.msra.mxu0 %v2169
    %2171 = vmatprep.subr.mxu0 0.0
    %v2172 = vand.u32 %v1433, 4294901760
    %v2173 = vsub.f32 %v1433, %v2172
    %v2174 = vand.u32 %v2173, 4294901760
    %2175 = vmatpush1.msra.mxu0 %v2174
    %2176 = vmatprep.subr.mxu0 0.0
    %v2177 = vand.u32 %v1434, 4294901760
    %v2178 = vsub.f32 %v1434, %v2177
    %v2179 = vand.u32 %v2178, 4294901760
    %2180 = vmatpush1.msra.mxu0 %v2179
    %2181 = vmatprep.subr.mxu0 0.0
    %v2182 = vand.u32 %v1435, 4294901760
    %v2183 = vsub.f32 %v1435, %v2182
    %v2184 = vand.u32 %v2183, 4294901760
    %2185 = vmatpush1.msra.mxu0 %v2184
    %v2186 = vand.u32 %v1403, 4294901760
    %2187 = vmatprep.mubr.f32.mxu0 %v2186
    %v2188 = vand.u32 %v1402, 4294901760
    %2189 = vmatmul.mubr.f32.gmra.mrb[0].mxu0 %v2188
    %v2190 = vpop.f32.mrb[0].mxu0
    %v2191 = vadd.f32 %v2023, %v2190
    %v2192 = vpop.f32.mrb[0].mxu0
    %2193 = vdwg.mxu0
    %2194 = vmatprep.subr.mxu0 0.0
    %v2195 = vand.u32 %v1404, 4294901760
    %2196 = vmatpush1.msra.mxu0 %v2195
    %2197 = vmatprep.subr.mxu0 0.0
    %v2198 = vand.u32 %v1405, 4294901760
    %2199 = vmatpush1.msra.mxu0 %v2198
    %2200 = vmatprep.subr.mxu0 0.0
    %v2201 = vand.u32 %v1406, 4294901760
    %2202 = vmatpush1.msra.mxu0 %v2201
    %2203 = vmatprep.subr.mxu0 0.0
    %v2204 = vand.u32 %v1407, 4294901760
    %2205 = vmatpush1.msra.mxu0 %v2204
    %2206 = vmatprep.subr.mxu0 0.0
    %v2207 = vand.u32 %v1408, 4294901760
    %2208 = vmatpush1.msra.mxu0 %v2207
    %2209 = vmatprep.subr.mxu0 0.0
    %v2210 = vand.u32 %v1409, 4294901760
    %2211 = vmatpush1.msra.mxu0 %v2210
    %2212 = vmatprep.subr.mxu0 0.0
    %v2213 = vand.u32 %v1410, 4294901760
    %2214 = vmatpush1.msra.mxu0 %v2213
    %2215 = vmatprep.subr.mxu0 0.0
    %v2216 = vand.u32 %v1411, 4294901760
    %2217 = vmatpush1.msra.mxu0 %v2216
    %2218 = vmatprep.subr.mxu0 0.0
    %v2219 = vand.u32 %v1412, 4294901760
    %2220 = vmatpush1.msra.mxu0 %v2219
    %2221 = vmatprep.subr.mxu0 0.0
    %v2222 = vand.u32 %v1413, 4294901760
    %2223 = vmatpush1.msra.mxu0 %v2222
    %2224 = vmatprep.subr.mxu0 0.0
    %v2225 = vand.u32 %v1414, 4294901760
    %2226 = vmatpush1.msra.mxu0 %v2225
    %2227 = vmatprep.subr.mxu0 0.0
    %v2228 = vand.u32 %v1415, 4294901760
    %2229 = vmatpush1.msra.mxu0 %v2228
    %2230 = vmatprep.subr.mxu0 0.0
    %v2231 = vand.u32 %v1416, 4294901760
    %2232 = vmatpush1.msra.mxu0 %v2231
    %2233 = vmatprep.subr.mxu0 0.0
    %v2234 = vand.u32 %v1417, 4294901760
    %2235 = vmatpush1.msra.mxu0 %v2234
    %2236 = vmatprep.subr.mxu0 0.0
    %v2237 = vand.u32 %v1418, 4294901760
    %2238 = vmatpush1.msra.mxu0 %v2237
    %2239 = vmatprep.subr.mxu0 0.0
    %v2240 = vand.u32 %v1419, 4294901760
    %2241 = vmatpush1.msra.mxu0 %v2240
    %2242 = vmatprep.subr.mxu0 0.0
    %v2243 = vand.u32 %v1420, 4294901760
    %2244 = vmatpush1.msra.mxu0 %v2243
    %2245 = vmatprep.subr.mxu0 0.0
    %v2246 = vand.u32 %v1421, 4294901760
    %2247 = vmatpush1.msra.mxu0 %v2246
    %2248 = vmatprep.subr.mxu0 0.0
    %v2249 = vand.u32 %v1422, 4294901760
    %2250 = vmatpush1.msra.mxu0 %v2249
    %2251 = vmatprep.subr.mxu0 0.0
    %v2252 = vand.u32 %v1423, 4294901760
    %2253 = vmatpush1.msra.mxu0 %v2252
    %2254 = vmatprep.subr.mxu0 0.0
    %v2255 = vand.u32 %v1424, 4294901760
    %2256 = vmatpush1.msra.mxu0 %v2255
    %2257 = vmatprep.subr.mxu0 0.0
    %v2258 = vand.u32 %v1425, 4294901760
    %2259 = vmatpush1.msra.mxu0 %v2258
    %2260 = vmatprep.subr.mxu0 0.0
    %v2261 = vand.u32 %v1426, 4294901760
    %2262 = vmatpush1.msra.mxu0 %v2261
    %2263 = vmatprep.subr.mxu0 0.0
    %v2264 = vand.u32 %v1427, 4294901760
    %2265 = vmatpush1.msra.mxu0 %v2264
    %2266 = vmatprep.subr.mxu0 0.0
    %v2267 = vand.u32 %v1428, 4294901760
    %2268 = vmatpush1.msra.mxu0 %v2267
    %2269 = vmatprep.subr.mxu0 0.0
    %v2270 = vand.u32 %v1429, 4294901760
    %2271 = vmatpush1.msra.mxu0 %v2270
    %2272 = vmatprep.subr.mxu0 0.0
    %v2273 = vand.u32 %v1430, 4294901760
    %2274 = vmatpush1.msra.mxu0 %v2273
    %2275 = vmatprep.subr.mxu0 0.0
    %v2276 = vand.u32 %v1431, 4294901760
    %2277 = vmatpush1.msra.mxu0 %v2276
    %2278 = vmatprep.subr.mxu0 0.0
    %v2279 = vand.u32 %v1432, 4294901760
    %2280 = vmatpush1.msra.mxu0 %v2279
    %2281 = vmatprep.subr.mxu0 0.0
    %v2282 = vand.u32 %v1433, 4294901760
    %2283 = vmatpush1.msra.mxu0 %v2282
    %2284 = vmatprep.subr.mxu0 0.0
    %v2285 = vand.u32 %v1434, 4294901760
    %2286 = vmatpush1.msra.mxu0 %v2285
    %2287 = vmatprep.subr.mxu0 0.0
    %v2288 = vand.u32 %v1435, 4294901760
    %2289 = vmatpush1.msra.mxu0 %v2288
    %v2290 = vand.u32 %v1403, 4294901760
    %2291 = vmatprep.mubr.f32.mxu0 %v2290
    %v2292 = vand.u32 %v1402, 4294901760
    %2293 = vmatmul.mubr.f32.gmra.mrb[0].mxu0 %v2292
    %v2294 = vpop.f32.mrb[0].mxu0
    %v2295 = vadd.f32 %v2191, %v2294
    %v2296 = vpop.f32.mrb[0].mxu0
    %2297 = vdwg.mxu0
    %v2298 = vmul.f32 %v2295, %v931
    %vm2299 = vcmask 261120
    %2300 = vst.msk [vmem:[#allocation3] sm:$0xff] %vm2299, %v2298
    // Predicated region
    $region22: #{tpu_custom_call.1} parent=1 // pred_check
      _
    $region23: #{tpu_custom_call.1} parent=1 // pred_check_branch
      %2302 = sbr.rel (0) target = $region25
    $region24: #{tpu_custom_call.1} parent=1 // pred_region
      %s2304 = ssub.s32 128, 128
      %2305 = vsyncadd [#allocation4], %s2304
      %s2307 = sshll.u32 [#allocation3], 4
      %s2308 = int_to_ptr.vmem [resolvable:$true] %s2307
      %2310 = dma.vmem_to_hbm [thread:$0]  %s2308, 128, %s5, [#allocation4]
    $region25: #{tpu_custom_call.1} parent=1 // pred_fallthru
      _
    // Predicated region
    $region26: #{tpu_custom_call.1} parent=1 // pred_check
      _
    $region27: #{tpu_custom_call.1} parent=1 // pred_check_branch
      %2312 = sbr.rel (0) target = $region29
    $region28: #{tpu_custom_call.1} parent=1 // pred_region
      %2313 = dma.done [#allocation4], 128
    $region29: #{tpu_custom_call.1} parent=1 // pred_fallthru
      _
    %2314 = vsyncpa [#allocation4], 1

</llo_original>
